<compile_context>
chip_gen: v5e
topology: v5e:2x2
jax: 0.10.0
libtpu: 0.0.40
codegen_flags: <defaults>
</compile_context>

<pallas_src>
import functools

import jax
import jax.numpy as jnp
import numpy as np
from jax import lax
from jax.experimental import pallas as pl
from jax.experimental.pallas import tpu as pltpu


# ----------------------------------------------------------------------------
# Kernel: one grid step = one time chunk of the bidirectional LSTM recurrence.
# The final Linear classifier is applied in-kernel on the last chunk.
# ----------------------------------------------------------------------------
def _bilstm_classifier_kernel(
    x_fwd_ref,    # (1, Tc*B, E) bf16 : time chunk k        (rows = t_local*B + b)
    x_bwd_ref,    # (1, Tc*B, E) bf16 : time chunk K-1-k    (for the backward dir)
    wih_f_ref,    # (E, 4H) bf16 : fused input->hidden, fwd, gate order [i|f|g|o]
    wih_b_ref,    # (E, 4H) bf16 : bwd
    b_f_ref,      # (1, 4H) f32  : b_ih + b_hh, fwd
    b_b_ref,      # (1, 4H) f32  : bwd
    whh_f_ref,    # (H, 4H) bf16 : fused hidden->hidden, fwd
    whh_b_ref,    # (H, 4H) bf16 : bwd
    wlin_f_ref,   # (H, C)  bf16 : classifier rows acting on the fwd hidden
    wlin_b_ref,   # (H, C)  bf16 : classifier rows acting on the bwd hidden
    blin_ref,     # (1, C)  f32
    out_ref,      # (B, C)  f32
    h_f_ref, c_f_ref, h_b_ref, c_b_ref,   # (B, H) f32 VMEM scratch (carry)
):
    k = pl.program_id(0)
    n_chunks = pl.num_programs(0)
    B, H = h_f_ref.shape
    TC = x_fwd_ref.shape[1] // B

    @pl.when(k == 0)
    def _init():
        z = jnp.zeros((B, H), jnp.float32)
        h_f_ref[...] = z
        c_f_ref[...] = z
        h_b_ref[...] = z
        c_b_ref[...] = z

    # Hoisted, fused input projection for the whole chunk (bias folded in):
    # one lane-dense (Tc*B, E) @ (E, 4H) matmul per direction.
    z_f = (
        jnp.dot(x_fwd_ref[0], wih_f_ref[...], preferred_element_type=jnp.float32)
        + b_f_ref[...]
    )
    z_b = (
        jnp.dot(x_bwd_ref[0], wih_b_ref[...], preferred_element_type=jnp.float32)
        + b_b_ref[...]
    )

    def cell(z_t, h, c, whh_ref):
        # Single fused (B, H) @ (H, 4H) recurrent matmul; gate math in f32.
        g = z_t + jnp.dot(
            h.astype(whh_ref.dtype), whh_ref[...], preferred_element_type=jnp.float32
        )
        i = jax.nn.sigmoid(g[:, 0 * H:1 * H])
        f = jax.nn.sigmoid(g[:, 1 * H:2 * H])
        gc = jnp.tanh(g[:, 2 * H:3 * H])
        o = jax.nn.sigmoid(g[:, 3 * H:4 * H])
        c_new = f * c + i * gc
        h_new = o * jnp.tanh(c_new)
        return h_new, c_new

    hf = h_f_ref[...]
    cf = c_f_ref[...]
    hb = h_b_ref[...]
    cb = c_b_ref[...]

    # Fully unrolled over the (small, static) chunk. The forward and backward
    # chains are independent, so the scheduler interleaves their latency.
    # Backward direction consumes global timestep T-1-s, which lives at local
    # offset (TC-1-t) inside chunk K-1-k.
    for t in range(TC):
        hf, cf = cell(z_f[t * B:(t + 1) * B], hf, cf, whh_f_ref)
        hb, cb = cell(z_b[(TC - 1 - t) * B:(TC - t) * B], hb, cb, whh_b_ref)

    # One scratch store per chunk (not per timestep).
    h_f_ref[...] = hf
    c_f_ref[...] = cf
    h_b_ref[...] = hb
    c_b_ref[...] = cb

    @pl.when(k == n_chunks - 1)
    def _finalize():
        # logits = concat(h_fwd, h_bwd) @ W_lin^T + b_lin
        out_ref[...] = (
            jnp.dot(hf.astype(wlin_f_ref.dtype), wlin_f_ref[...],
                    preferred_element_type=jnp.float32)
            + jnp.dot(hb.astype(wlin_b_ref.dtype), wlin_b_ref[...],
                      preferred_element_type=jnp.float32)
            + blin_ref[...]
        ).astype(out_ref.dtype)


# ----------------------------------------------------------------------------
# Wrapper
# ----------------------------------------------------------------------------
@functools.partial(jax.jit, static_argnames=("time_chunk",))
def classifier_forward(token_ids, params, *, time_chunk=4):
    """token_ids: (B, T) int32 -> logits (B, n_classes) float32."""
    emb = params["embedding"]                    # (vocab, E) f32
    B, T = token_ids.shape
    E = emb.shape[1]
    H = params["whh_f"].shape[0]
    C = params["blin"].shape[-1]
    assert T % time_chunk == 0, "T must be a multiple of time_chunk"
    K = T // time_chunk

    # Pad batch to a multiple of 8 sublanes so per-timestep row slices inside
    # the kernel are tile-aligned; padded rows are discarded at the end.
    B_pad = ((B + 7) // 8) * 8
    tok = token_ids if B_pad == B else jnp.pad(token_ids, ((0, B_pad - B), (0, 0)))
    TCB = time_chunk * B_pad

    # Embedding gather (JAX glue), time-major, chunked, bf16 matmul operands.
    x = jnp.take(emb, tok, axis=0)                           # (B_pad, T, E)
    x = jnp.transpose(x, (1, 0, 2))                          # (T, B_pad, E)
    x = x.reshape(K, TCB, E).astype(jnp.bfloat16)            # (K, Tc*B_pad, E)

    vmem = pl.BlockSpec(memory_space=pltpu.MemorySpace.VMEM)

    cost = pl.CostEstimate(
        flops=int(2 * 2 * T * B_pad * 4 * H * (E + H) + 2 * 2 * B_pad * H * C),
        transcendentals=int(2 * T * B_pad * 5 * H),
        bytes_accessed=int(
            2 * T * B_pad * E * 2                          # x streamed twice (bf16)
            + 2 * (E * 4 * H + H * 4 * H + H * C) * 2      # bf16 weights, both dirs
            + 2 * 4 * H * 4 + C * 4                        # biases (f32)
            + B_pad * C * 4                                # logits
        ),
    )

    grid_spec = pltpu.PrefetchScalarGridSpec(
        num_scalar_prefetch=0,
        grid=(K,),
        in_specs=[
            # forward direction streams chunk k; backward streams chunk K-1-k.
            pl.BlockSpec((1, TCB, E), lambda k: (k, 0, 0)),
            pl.BlockSpec((1, TCB, E), lambda k: (K - 1 - k, 0, 0)),
            vmem, vmem, vmem, vmem, vmem, vmem, vmem, vmem, vmem,
        ],
        out_specs=pl.BlockSpec((B_pad, C), lambda k: (0, 0)),
        scratch_shapes=[
            pltpu.VMEM((B_pad, H), jnp.float32),   # h fwd
            pltpu.VMEM((B_pad, H), jnp.float32),   # c fwd
            pltpu.VMEM((B_pad, H), jnp.float32),   # h bwd
            pltpu.VMEM((B_pad, H), jnp.float32),   # c bwd
        ],
    )

    # TODO(synk): for large B on v7x, add a leading "parallel" batch-grid axis
    # (or pl.core_map over the 2-TC mesh) so both TensorCores are used.
    out = pl.pallas_call(
        _bilstm_classifier_kernel,
        out_shape=jax.ShapeDtypeStruct((B_pad, C), jnp.float32),
        grid_spec=grid_spec,
        compiler_params=pltpu.CompilerParams(
            dimension_semantics=("arbitrary",),   # sequential recurrence over time
            vmem_limit_bytes=32 * 1024 * 1024,
        ),
        cost_estimate=cost,
    )(
        x, x,
        params["wih_f"], params["wih_b"],
        params["b_f"], params["b_b"],
        params["whh_f"], params["whh_b"],
        params["wlin_f"], params["wlin_b"],
        params["blin"],
    )
    return out[:B]


# ----------------------------------------------------------------------------
# Deterministic parameter construction (fused-gate layout, gate order i,f,g,o).
# Matmul weights are stored in bf16 (operands); biases / embedding in f32.
# ----------------------------------------------------------------------------
def make_params(key, vocab_size, emb_dim, hidden_dim, n_classes):
    ks = jax.random.split(key, 12)
    H, E, C = hidden_dim, emb_dim, n_classes
    bound = 1.0 / np.sqrt(H)

    def u(k, shape):
        return jax.random.uniform(k, shape, jnp.float32, -bound, bound)

    return {
        "embedding": jax.random.normal(ks[0], (vocab_size, E), jnp.float32),
        # Fused gates along the last axis: columns [i | f | g | o], each H wide.
        "wih_f": u(ks[1], (E, 4 * H)).astype(jnp.bfloat16),
        "whh_f": u(ks[2], (H, 4 * H)).astype(jnp.bfloat16),
        "b_f":   u(ks[3], (1, 4 * H)) + u(ks[4], (1, 4 * H)),   # b_ih + b_hh
        "wih_b": u(ks[5], (E, 4 * H)).astype(jnp.bfloat16),
        "whh_b": u(ks[6], (H, 4 * H)).astype(jnp.bfloat16),
        "b_b":   u(ks[7], (1, 4 * H)) + u(ks[8], (1, 4 * H)),
        # Linear(2H, C) split into the rows acting on fwd / bwd hidden halves.
        "wlin_f": u(ks[9], (H, C)).astype(jnp.bfloat16),
        "wlin_b": u(ks[10], (H, C)).astype(jnp.bfloat16),
        "blin":   u(ks[11], (1, C)),
    }


# ----------------------------------------------------------------------------
# Pure-JAX reference with the same numerics (bf16 matmul operands, f32
# accumulation, f32 gate math) — validates the Pallas implementation.
# ----------------------------------------------------------------------------
def reference_forward(token_ids, params):
    H = params["whh_f"].shape[0]
    x = jnp.take(params["embedding"], token_ids, axis=0)      # (B, T, E)
    B, T, E = x.shape
    xs = jnp.transpose(x, (1, 0, 2)).astype(jnp.bfloat16)     # (T, B, E)

    def run_dir(xseq, wih, whh, b):
        z = jnp.dot(xseq.reshape(T * B, E), wih,
                    preferred_element_type=jnp.float32).reshape(T, B, 4 * H) + b

        def cell(carry, z_t):
            h, c = carry
            g = z_t + jnp.dot(h.astype(jnp.bfloat16), whh,
                              preferred_element_type=jnp.float32)
            i = jax.nn.sigmoid(g[:, 0 * H:1 * H])
            f = jax.nn.sigmoid(g[:, 1 * H:2 * H])
            gc = jnp.tanh(g[:, 2 * H:3 * H])
            o = jax.nn.sigmoid(g[:, 3 * H:4 * H])
            c_new = f * c + i * gc
            h_new = o * jnp.tanh(c_new)
            return (h_new, c_new), None

        h0 = jnp.zeros((B, H), jnp.float32)
        (h_fin, _), _ = lax.scan(cell, (h0, h0), z)
        return h_fin

    h_f = run_dir(xs, params["wih_f"], params["whh_f"], params["b_f"])
    h_b = run_dir(xs[::-1], params["wih_b"], params["whh_b"], params["b_b"])
    return (
        jnp.dot(h_f.astype(jnp.bfloat16), params["wlin_f"],
                preferred_element_type=jnp.float32)
        + jnp.dot(h_b.astype(jnp.bfloat16), params["wlin_b"],
                  preferred_element_type=jnp.float32)
        + params["blin"]
    )


if __name__ == "__main__":
    # Small shapes consistent with the module's forward pass.
    B, T = 4, 8
    vocab_size, emb_dim, hidden_dim, n_classes = 50, 32, 32, 4

    key = jax.random.PRNGKey(0)
    k_tok, k_par = jax.random.split(key)
    token_ids = jax.random.randint(k_tok, (B, T), 0, vocab_size, dtype=jnp.int32)
    params = make_params(k_par, vocab_size, emb_dim, hidden_dim, n_classes)

    logits = classifier_forward(token_ids, params, time_chunk=4)
    jax.block_until_ready(logits)

    ref = reference_forward(token_ids, params)
    np.testing.assert_allclose(np.asarray(logits), np.asarray(ref),
                               rtol=1e-2, atol=1e-2)

    print("KERNEL_OK")
</pallas_src>

<mosaic_0001>
module attributes {stable_mosaic.version = 11 : i64} {
  func.func @_bilstm_classifier_kernel(%arg0: i32, %arg1: memref<1x32x32xbf16, #tpu.memory_space<vmem>>, %arg2: memref<1x32x32xbf16, #tpu.memory_space<vmem>>, %arg3: memref<32x128xbf16, #tpu.memory_space<vmem>>, %arg4: memref<32x128xbf16, #tpu.memory_space<vmem>>, %arg5: memref<1x128xf32, #tpu.memory_space<vmem>>, %arg6: memref<1x128xf32, #tpu.memory_space<vmem>>, %arg7: memref<32x128xbf16, #tpu.memory_space<vmem>>, %arg8: memref<32x128xbf16, #tpu.memory_space<vmem>>, %arg9: memref<32x4xbf16, #tpu.memory_space<vmem>>, %arg10: memref<32x4xbf16, #tpu.memory_space<vmem>>, %arg11: memref<1x4xf32, #tpu.memory_space<vmem>>, %arg12: memref<8x4xf32, #tpu.memory_space<vmem>>, %arg13: memref<8x32xf32, #tpu.memory_space<vmem>>, %arg14: memref<8x32xf32, #tpu.memory_space<vmem>>, %arg15: memref<8x32xf32, #tpu.memory_space<vmem>>, %arg16: memref<8x32xf32, #tpu.memory_space<vmem>>) attributes {dimension_semantics = [#tpu.dimension_semantics<arbitrary>], iteration_bounds = array<i64: 2>, scalar_prefetch = 0 : i64, scratch_operands = 4 : i64, tpu.core_type = #tpu.core_type<tc>, window_params = [{transform_indices = @transform_0, window_bounds = array<i64: 1, 32, 32>}, {transform_indices = @transform_1, window_bounds = array<i64: 1, 32, 32>}, {pipeline_mode = #tpu.pipeline_mode<synchronous>, transform_indices = @transform_2, window_bounds = array<i64: 32, 128>}, {pipeline_mode = #tpu.pipeline_mode<synchronous>, transform_indices = @transform_3, window_bounds = array<i64: 32, 128>}, {pipeline_mode = #tpu.pipeline_mode<synchronous>, transform_indices = @transform_4, window_bounds = array<i64: 1, 128>}, {pipeline_mode = #tpu.pipeline_mode<synchronous>, transform_indices = @transform_5, window_bounds = array<i64: 1, 128>}, {pipeline_mode = #tpu.pipeline_mode<synchronous>, transform_indices = @transform_6, window_bounds = array<i64: 32, 128>}, {pipeline_mode = #tpu.pipeline_mode<synchronous>, transform_indices = @transform_7, window_bounds = array<i64: 32, 128>}, {pipeline_mode = #tpu.pipeline_mode<synchronous>, transform_indices = @transform_8, window_bounds = array<i64: 32, 4>}, {pipeline_mode = #tpu.pipeline_mode<synchronous>, transform_indices = @transform_9, window_bounds = array<i64: 32, 4>}, {pipeline_mode = #tpu.pipeline_mode<synchronous>, transform_indices = @transform_10, window_bounds = array<i64: 1, 4>}, {pipeline_mode = #tpu.pipeline_mode<synchronous>, transform_indices = @transform_11, window_bounds = array<i64: 8, 4>}]} {
    %c0_i32 = arith.constant 0 : i32
    %0 = arith.cmpi eq, %arg0, %c0_i32 : i32
    %1 = arith.extui %0 : i1 to i32
    %c0_i32_0 = arith.constant 0 : i32
    %2 = arith.cmpi ne, %1, %c0_i32_0 : i32
    scf.if %2 {
      %cst_80 = arith.constant 0.000000e+00 : f32
      %268 = vector.broadcast %cst_80 : f32 to vector<8x32xf32>
      %c0_81 = arith.constant 0 : index
      %c0_82 = arith.constant 0 : index
      %269 = vector.load %arg13[%c0_81, %c0_82] : memref<8x32xf32, #tpu.memory_space<vmem>>, vector<8x32xf32>
      tpu.vector_store %arg13[%c0_81, %c0_82], %268 {strides = array<i32>} : memref<8x32xf32, #tpu.memory_space<vmem>>, vector<8x32xf32>,
      %c0_83 = arith.constant 0 : index
      %c0_84 = arith.constant 0 : index
      %270 = vector.load %arg14[%c0_83, %c0_84] : memref<8x32xf32, #tpu.memory_space<vmem>>, vector<8x32xf32>
      tpu.vector_store %arg14[%c0_83, %c0_84], %268 {strides = array<i32>} : memref<8x32xf32, #tpu.memory_space<vmem>>, vector<8x32xf32>,
      %c0_85 = arith.constant 0 : index
      %c0_86 = arith.constant 0 : index
      %271 = vector.load %arg15[%c0_85, %c0_86] : memref<8x32xf32, #tpu.memory_space<vmem>>, vector<8x32xf32>
      tpu.vector_store %arg15[%c0_85, %c0_86], %268 {strides = array<i32>} : memref<8x32xf32, #tpu.memory_space<vmem>>, vector<8x32xf32>,
      %c0_87 = arith.constant 0 : index
      %c0_88 = arith.constant 0 : index
      %272 = vector.load %arg16[%c0_87, %c0_88] : memref<8x32xf32, #tpu.memory_space<vmem>>, vector<8x32xf32>
      tpu.vector_store %arg16[%c0_87, %c0_88], %268 {strides = array<i32>} : memref<8x32xf32, #tpu.memory_space<vmem>>, vector<8x32xf32>,
    } else {
    }
    %c0 = arith.constant 0 : index
    %c0_1 = arith.constant 0 : index
    %c0_2 = arith.constant 0 : index
    %3 = vector.load %arg1[%c0, %c0_1, %c0_2] : memref<1x32x32xbf16, #tpu.memory_space<vmem>>, vector<1x32x32xbf16>
    %4 = vector.shape_cast %3 : vector<1x32x32xbf16> to vector<32x32xbf16>
    %c0_3 = arith.constant 0 : index
    %c0_4 = arith.constant 0 : index
    %5 = vector.load %arg3[%c0_3, %c0_4] : memref<32x128xbf16, #tpu.memory_space<vmem>>, vector<32x128xbf16>
    %cst = arith.constant dense<0.000000e+00> : vector<32x128xf32>
    %6 = tpu.matmul %4, %5, %cst {dimension_numbers = #tpu.dot_dimension_numbers<[1], [0], [0], [1], [0, 0, 1, 1], [], []>} : vector<32x32xbf16>, vector<32x128xbf16>, vector<32x128xf32> -> vector<32x128xf32>
    %c0_5 = arith.constant 0 : index
    %c0_6 = arith.constant 0 : index
    %7 = vector.load %arg5[%c0_5, %c0_6] : memref<1x128xf32, #tpu.memory_space<vmem>>, vector<1x128xf32>
    %8 = vector.broadcast %7 : vector<1x128xf32> to vector<32x128xf32>
    %9 = arith.addf %6, %8 : vector<32x128xf32>
    %c0_7 = arith.constant 0 : index
    %c0_8 = arith.constant 0 : index
    %c0_9 = arith.constant 0 : index
    %10 = vector.load %arg2[%c0_7, %c0_8, %c0_9] : memref<1x32x32xbf16, #tpu.memory_space<vmem>>, vector<1x32x32xbf16>
    %11 = vector.shape_cast %10 : vector<1x32x32xbf16> to vector<32x32xbf16>
    %c0_10 = arith.constant 0 : index
    %c0_11 = arith.constant 0 : index
    %12 = vector.load %arg4[%c0_10, %c0_11] : memref<32x128xbf16, #tpu.memory_space<vmem>>, vector<32x128xbf16>
    %cst_12 = arith.constant dense<0.000000e+00> : vector<32x128xf32>
    %13 = tpu.matmul %11, %12, %cst_12 {dimension_numbers = #tpu.dot_dimension_numbers<[1], [0], [0], [1], [0, 0, 1, 1], [], []>} : vector<32x32xbf16>, vector<32x128xbf16>, vector<32x128xf32> -> vector<32x128xf32>
    %c0_13 = arith.constant 0 : index
    %c0_14 = arith.constant 0 : index
    %14 = vector.load %arg6[%c0_13, %c0_14] : memref<1x128xf32, #tpu.memory_space<vmem>>, vector<1x128xf32>
    %15 = vector.broadcast %14 : vector<1x128xf32> to vector<32x128xf32>
    %16 = arith.addf %13, %15 : vector<32x128xf32>
    %c0_15 = arith.constant 0 : index
    %c0_16 = arith.constant 0 : index
    %17 = vector.load %arg13[%c0_15, %c0_16] : memref<8x32xf32, #tpu.memory_space<vmem>>, vector<8x32xf32>
    %c0_17 = arith.constant 0 : index
    %c0_18 = arith.constant 0 : index
    %18 = vector.load %arg14[%c0_17, %c0_18] : memref<8x32xf32, #tpu.memory_space<vmem>>, vector<8x32xf32>
    %c0_19 = arith.constant 0 : index
    %c0_20 = arith.constant 0 : index
    %19 = vector.load %arg15[%c0_19, %c0_20] : memref<8x32xf32, #tpu.memory_space<vmem>>, vector<8x32xf32>
    %c0_21 = arith.constant 0 : index
    %c0_22 = arith.constant 0 : index
    %20 = vector.load %arg16[%c0_21, %c0_22] : memref<8x32xf32, #tpu.memory_space<vmem>>, vector<8x32xf32>
    %21 = vector.extract_strided_slice %9 {offsets = [0, 0], sizes = [8, 128], strides = [1, 1]} : vector<32x128xf32> to vector<8x128xf32>
    %22 = arith.truncf %17 : vector<8x32xf32> to vector<8x32xbf16>
    %c0_23 = arith.constant 0 : index
    %c0_24 = arith.constant 0 : index
    %23 = vector.load %arg7[%c0_23, %c0_24] : memref<32x128xbf16, #tpu.memory_space<vmem>>, vector<32x128xbf16>
    %cst_25 = arith.constant dense<0.000000e+00> : vector<8x128xf32>
    %24 = tpu.matmul %22, %23, %cst_25 {dimension_numbers = #tpu.dot_dimension_numbers<[1], [0], [0], [1], [0, 0, 1, 1], [], []>} : vector<8x32xbf16>, vector<32x128xbf16>, vector<8x128xf32> -> vector<8x128xf32>
    %25 = arith.addf %21, %24 : vector<8x128xf32>
    %26 = vector.extract_strided_slice %25 {offsets = [0, 0], sizes = [8, 32], strides = [1, 1]} : vector<8x128xf32> to vector<8x32xf32>
    %27 = arith.negf %26 : vector<8x32xf32>
    %28 = math.exp %27 : vector<8x32xf32>
    %cst_26 = arith.constant 1.000000e+00 : f32
    %29 = vector.broadcast %cst_26 : f32 to vector<8x32xf32>
    %30 = arith.addf %29, %28 : vector<8x32xf32>
    %31 = arith.divf %29, %30 : vector<8x32xf32>
    %32 = vector.extract_strided_slice %25 {offsets = [0, 32], sizes = [8, 32], strides = [1, 1]} : vector<8x128xf32> to vector<8x32xf32>
    %33 = arith.negf %32 : vector<8x32xf32>
    %34 = math.exp %33 : vector<8x32xf32>
    %cst_27 = arith.constant 1.000000e+00 : f32
    %35 = vector.broadcast %cst_27 : f32 to vector<8x32xf32>
    %36 = arith.addf %35, %34 : vector<8x32xf32>
    %37 = arith.divf %35, %36 : vector<8x32xf32>
    %38 = vector.extract_strided_slice %25 {offsets = [0, 64], sizes = [8, 32], strides = [1, 1]} : vector<8x128xf32> to vector<8x32xf32>
    %39 = math.tanh %38 : vector<8x32xf32>
    %40 = vector.extract_strided_slice %25 {offsets = [0, 96], sizes = [8, 32], strides = [1, 1]} : vector<8x128xf32> to vector<8x32xf32>
    %41 = arith.negf %40 : vector<8x32xf32>
    %42 = math.exp %41 : vector<8x32xf32>
    %cst_28 = arith.constant 1.000000e+00 : f32
    %43 = vector.broadcast %cst_28 : f32 to vector<8x32xf32>
    %44 = arith.addf %43, %42 : vector<8x32xf32>
    %45 = arith.divf %43, %44 : vector<8x32xf32>
    %46 = arith.mulf %37, %18 : vector<8x32xf32>
    %47 = arith.mulf %31, %39 : vector<8x32xf32>
    %48 = arith.addf %46, %47 : vector<8x32xf32>
    %49 = math.tanh %48 : vector<8x32xf32>
    %50 = arith.mulf %45, %49 : vector<8x32xf32>
    %51 = vector.extract_strided_slice %16 {offsets = [24, 0], sizes = [8, 128], strides = [1, 1]} : vector<32x128xf32> to vector<8x128xf32>
    %52 = arith.truncf %19 : vector<8x32xf32> to vector<8x32xbf16>
    %c0_29 = arith.constant 0 : index
    %c0_30 = arith.constant 0 : index
    %53 = vector.load %arg8[%c0_29, %c0_30] : memref<32x128xbf16, #tpu.memory_space<vmem>>, vector<32x128xbf16>
    %cst_31 = arith.constant dense<0.000000e+00> : vector<8x128xf32>
    %54 = tpu.matmul %52, %53, %cst_31 {dimension_numbers = #tpu.dot_dimension_numbers<[1], [0], [0], [1], [0, 0, 1, 1], [], []>} : vector<8x32xbf16>, vector<32x128xbf16>, vector<8x128xf32> -> vector<8x128xf32>
    %55 = arith.addf %51, %54 : vector<8x128xf32>
    %56 = vector.extract_strided_slice %55 {offsets = [0, 0], sizes = [8, 32], strides = [1, 1]} : vector<8x128xf32> to vector<8x32xf32>
    %57 = arith.negf %56 : vector<8x32xf32>
    %58 = math.exp %57 : vector<8x32xf32>
    %cst_32 = arith.constant 1.000000e+00 : f32
    %59 = vector.broadcast %cst_32 : f32 to vector<8x32xf32>
    %60 = arith.addf %59, %58 : vector<8x32xf32>
    %61 = arith.divf %59, %60 : vector<8x32xf32>
    %62 = vector.extract_strided_slice %55 {offsets = [0, 32], sizes = [8, 32], strides = [1, 1]} : vector<8x128xf32> to vector<8x32xf32>
    %63 = arith.negf %62 : vector<8x32xf32>
    %64 = math.exp %63 : vector<8x32xf32>
    %cst_33 = arith.constant 1.000000e+00 : f32
    %65 = vector.broadcast %cst_33 : f32 to vector<8x32xf32>
    %66 = arith.addf %65, %64 : vector<8x32xf32>
    %67 = arith.divf %65, %66 : vector<8x32xf32>
    %68 = vector.extract_strided_slice %55 {offsets = [0, 64], sizes = [8, 32], strides = [1, 1]} : vector<8x128xf32> to vector<8x32xf32>
    %69 = math.tanh %68 : vector<8x32xf32>
    %70 = vector.extract_strided_slice %55 {offsets = [0, 96], sizes = [8, 32], strides = [1, 1]} : vector<8x128xf32> to vector<8x32xf32>
    %71 = arith.negf %70 : vector<8x32xf32>
    %72 = math.exp %71 : vector<8x32xf32>
    %cst_34 = arith.constant 1.000000e+00 : f32
    %73 = vector.broadcast %cst_34 : f32 to vector<8x32xf32>
    %74 = arith.addf %73, %72 : vector<8x32xf32>
    %75 = arith.divf %73, %74 : vector<8x32xf32>
    %76 = arith.mulf %67, %20 : vector<8x32xf32>
    %77 = arith.mulf %61, %69 : vector<8x32xf32>
    %78 = arith.addf %76, %77 : vector<8x32xf32>
    %79 = math.tanh %78 : vector<8x32xf32>
    %80 = arith.mulf %75, %79 : vector<8x32xf32>
    %81 = vector.extract_strided_slice %9 {offsets = [8, 0], sizes = [8, 128], strides = [1, 1]} : vector<32x128xf32> to vector<8x128xf32>
    %82 = arith.truncf %50 : vector<8x32xf32> to vector<8x32xbf16>
    %c0_35 = arith.constant 0 : index
    %c0_36 = arith.constant 0 : index
    %83 = vector.load %arg7[%c0_35, %c0_36] : memref<32x128xbf16, #tpu.memory_space<vmem>>, vector<32x128xbf16>
    %cst_37 = arith.constant dense<0.000000e+00> : vector<8x128xf32>
    %84 = tpu.matmul %82, %83, %cst_37 {dimension_numbers = #tpu.dot_dimension_numbers<[1], [0], [0], [1], [0, 0, 1, 1], [], []>} : vector<8x32xbf16>, vector<32x128xbf16>, vector<8x128xf32> -> vector<8x128xf32>
    %85 = arith.addf %81, %84 : vector<8x128xf32>
    %86 = vector.extract_strided_slice %85 {offsets = [0, 0], sizes = [8, 32], strides = [1, 1]} : vector<8x128xf32> to vector<8x32xf32>
    %87 = arith.negf %86 : vector<8x32xf32>
    %88 = math.exp %87 : vector<8x32xf32>
    %cst_38 = arith.constant 1.000000e+00 : f32
    %89 = vector.broadcast %cst_38 : f32 to vector<8x32xf32>
    %90 = arith.addf %89, %88 : vector<8x32xf32>
    %91 = arith.divf %89, %90 : vector<8x32xf32>
    %92 = vector.extract_strided_slice %85 {offsets = [0, 32], sizes = [8, 32], strides = [1, 1]} : vector<8x128xf32> to vector<8x32xf32>
    %93 = arith.negf %92 : vector<8x32xf32>
    %94 = math.exp %93 : vector<8x32xf32>
    %cst_39 = arith.constant 1.000000e+00 : f32
    %95 = vector.broadcast %cst_39 : f32 to vector<8x32xf32>
    %96 = arith.addf %95, %94 : vector<8x32xf32>
    %97 = arith.divf %95, %96 : vector<8x32xf32>
    %98 = vector.extract_strided_slice %85 {offsets = [0, 64], sizes = [8, 32], strides = [1, 1]} : vector<8x128xf32> to vector<8x32xf32>
    %99 = math.tanh %98 : vector<8x32xf32>
    %100 = vector.extract_strided_slice %85 {offsets = [0, 96], sizes = [8, 32], strides = [1, 1]} : vector<8x128xf32> to vector<8x32xf32>
    %101 = arith.negf %100 : vector<8x32xf32>
    %102 = math.exp %101 : vector<8x32xf32>
    %cst_40 = arith.constant 1.000000e+00 : f32
    %103 = vector.broadcast %cst_40 : f32 to vector<8x32xf32>
    %104 = arith.addf %103, %102 : vector<8x32xf32>
    %105 = arith.divf %103, %104 : vector<8x32xf32>
    %106 = arith.mulf %97, %48 : vector<8x32xf32>
    %107 = arith.mulf %91, %99 : vector<8x32xf32>
    %108 = arith.addf %106, %107 : vector<8x32xf32>
    %109 = math.tanh %108 : vector<8x32xf32>
    %110 = arith.mulf %105, %109 : vector<8x32xf32>
    %111 = vector.extract_strided_slice %16 {offsets = [16, 0], sizes = [8, 128], strides = [1, 1]} : vector<32x128xf32> to vector<8x128xf32>
    %112 = arith.truncf %80 : vector<8x32xf32> to vector<8x32xbf16>
    %c0_41 = arith.constant 0 : index
    %c0_42 = arith.constant 0 : index
    %113 = vector.load %arg8[%c0_41, %c0_42] : memref<32x128xbf16, #tpu.memory_space<vmem>>, vector<32x128xbf16>
    %cst_43 = arith.constant dense<0.000000e+00> : vector<8x128xf32>
    %114 = tpu.matmul %112, %113, %cst_43 {dimension_numbers = #tpu.dot_dimension_numbers<[1], [0], [0], [1], [0, 0, 1, 1], [], []>} : vector<8x32xbf16>, vector<32x128xbf16>, vector<8x128xf32> -> vector<8x128xf32>
    %115 = arith.addf %111, %114 : vector<8x128xf32>
    %116 = vector.extract_strided_slice %115 {offsets = [0, 0], sizes = [8, 32], strides = [1, 1]} : vector<8x128xf32> to vector<8x32xf32>
    %117 = arith.negf %116 : vector<8x32xf32>
    %118 = math.exp %117 : vector<8x32xf32>
    %cst_44 = arith.constant 1.000000e+00 : f32
    %119 = vector.broadcast %cst_44 : f32 to vector<8x32xf32>
    %120 = arith.addf %119, %118 : vector<8x32xf32>
    %121 = arith.divf %119, %120 : vector<8x32xf32>
    %122 = vector.extract_strided_slice %115 {offsets = [0, 32], sizes = [8, 32], strides = [1, 1]} : vector<8x128xf32> to vector<8x32xf32>
    %123 = arith.negf %122 : vector<8x32xf32>
    %124 = math.exp %123 : vector<8x32xf32>
    %cst_45 = arith.constant 1.000000e+00 : f32
    %125 = vector.broadcast %cst_45 : f32 to vector<8x32xf32>
    %126 = arith.addf %125, %124 : vector<8x32xf32>
    %127 = arith.divf %125, %126 : vector<8x32xf32>
    %128 = vector.extract_strided_slice %115 {offsets = [0, 64], sizes = [8, 32], strides = [1, 1]} : vector<8x128xf32> to vector<8x32xf32>
    %129 = math.tanh %128 : vector<8x32xf32>
    %130 = vector.extract_strided_slice %115 {offsets = [0, 96], sizes = [8, 32], strides = [1, 1]} : vector<8x128xf32> to vector<8x32xf32>
    %131 = arith.negf %130 : vector<8x32xf32>
    %132 = math.exp %131 : vector<8x32xf32>
    %cst_46 = arith.constant 1.000000e+00 : f32
    %133 = vector.broadcast %cst_46 : f32 to vector<8x32xf32>
    %134 = arith.addf %133, %132 : vector<8x32xf32>
    %135 = arith.divf %133, %134 : vector<8x32xf32>
    %136 = arith.mulf %127, %78 : vector<8x32xf32>
    %137 = arith.mulf %121, %129 : vector<8x32xf32>
    %138 = arith.addf %136, %137 : vector<8x32xf32>
    %139 = math.tanh %138 : vector<8x32xf32>
    %140 = arith.mulf %135, %139 : vector<8x32xf32>
    %141 = vector.extract_strided_slice %9 {offsets = [16, 0], sizes = [8, 128], strides = [1, 1]} : vector<32x128xf32> to vector<8x128xf32>
    %142 = arith.truncf %110 : vector<8x32xf32> to vector<8x32xbf16>
    %c0_47 = arith.constant 0 : index
    %c0_48 = arith.constant 0 : index
    %143 = vector.load %arg7[%c0_47, %c0_48] : memref<32x128xbf16, #tpu.memory_space<vmem>>, vector<32x128xbf16>
    %cst_49 = arith.constant dense<0.000000e+00> : vector<8x128xf32>
    %144 = tpu.matmul %142, %143, %cst_49 {dimension_numbers = #tpu.dot_dimension_numbers<[1], [0], [0], [1], [0, 0, 1, 1], [], []>} : vector<8x32xbf16>, vector<32x128xbf16>, vector<8x128xf32> -> vector<8x128xf32>
    %145 = arith.addf %141, %144 : vector<8x128xf32>
    %146 = vector.extract_strided_slice %145 {offsets = [0, 0], sizes = [8, 32], strides = [1, 1]} : vector<8x128xf32> to vector<8x32xf32>
    %147 = arith.negf %146 : vector<8x32xf32>
    %148 = math.exp %147 : vector<8x32xf32>
    %cst_50 = arith.constant 1.000000e+00 : f32
    %149 = vector.broadcast %cst_50 : f32 to vector<8x32xf32>
    %150 = arith.addf %149, %148 : vector<8x32xf32>
    %151 = arith.divf %149, %150 : vector<8x32xf32>
    %152 = vector.extract_strided_slice %145 {offsets = [0, 32], sizes = [8, 32], strides = [1, 1]} : vector<8x128xf32> to vector<8x32xf32>
    %153 = arith.negf %152 : vector<8x32xf32>
    %154 = math.exp %153 : vector<8x32xf32>
    %cst_51 = arith.constant 1.000000e+00 : f32
    %155 = vector.broadcast %cst_51 : f32 to vector<8x32xf32>
    %156 = arith.addf %155, %154 : vector<8x32xf32>
    %157 = arith.divf %155, %156 : vector<8x32xf32>
    %158 = vector.extract_strided_slice %145 {offsets = [0, 64], sizes = [8, 32], strides = [1, 1]} : vector<8x128xf32> to vector<8x32xf32>
    %159 = math.tanh %158 : vector<8x32xf32>
    %160 = vector.extract_strided_slice %145 {offsets = [0, 96], sizes = [8, 32], strides = [1, 1]} : vector<8x128xf32> to vector<8x32xf32>
    %161 = arith.negf %160 : vector<8x32xf32>
    %162 = math.exp %161 : vector<8x32xf32>
    %cst_52 = arith.constant 1.000000e+00 : f32
    %163 = vector.broadcast %cst_52 : f32 to vector<8x32xf32>
    %164 = arith.addf %163, %162 : vector<8x32xf32>
    %165 = arith.divf %163, %164 : vector<8x32xf32>
    %166 = arith.mulf %157, %108 : vector<8x32xf32>
    %167 = arith.mulf %151, %159 : vector<8x32xf32>
    %168 = arith.addf %166, %167 : vector<8x32xf32>
    %169 = math.tanh %168 : vector<8x32xf32>
    %170 = arith.mulf %165, %169 : vector<8x32xf32>
    %171 = vector.extract_strided_slice %16 {offsets = [8, 0], sizes = [8, 128], strides = [1, 1]} : vector<32x128xf32> to vector<8x128xf32>
    %172 = arith.truncf %140 : vector<8x32xf32> to vector<8x32xbf16>
    %c0_53 = arith.constant 0 : index
    %c0_54 = arith.constant 0 : index
    %173 = vector.load %arg8[%c0_53, %c0_54] : memref<32x128xbf16, #tpu.memory_space<vmem>>, vector<32x128xbf16>
    %cst_55 = arith.constant dense<0.000000e+00> : vector<8x128xf32>
    %174 = tpu.matmul %172, %173, %cst_55 {dimension_numbers = #tpu.dot_dimension_numbers<[1], [0], [0], [1], [0, 0, 1, 1], [], []>} : vector<8x32xbf16>, vector<32x128xbf16>, vector<8x128xf32> -> vector<8x128xf32>
    %175 = arith.addf %171, %174 : vector<8x128xf32>
    %176 = vector.extract_strided_slice %175 {offsets = [0, 0], sizes = [8, 32], strides = [1, 1]} : vector<8x128xf32> to vector<8x32xf32>
    %177 = arith.negf %176 : vector<8x32xf32>
    %178 = math.exp %177 : vector<8x32xf32>
    %cst_56 = arith.constant 1.000000e+00 : f32
    %179 = vector.broadcast %cst_56 : f32 to vector<8x32xf32>
    %180 = arith.addf %179, %178 : vector<8x32xf32>
    %181 = arith.divf %179, %180 : vector<8x32xf32>
    %182 = vector.extract_strided_slice %175 {offsets = [0, 32], sizes = [8, 32], strides = [1, 1]} : vector<8x128xf32> to vector<8x32xf32>
    %183 = arith.negf %182 : vector<8x32xf32>
    %184 = math.exp %183 : vector<8x32xf32>
    %cst_57 = arith.constant 1.000000e+00 : f32
    %185 = vector.broadcast %cst_57 : f32 to vector<8x32xf32>
    %186 = arith.addf %185, %184 : vector<8x32xf32>
    %187 = arith.divf %185, %186 : vector<8x32xf32>
    %188 = vector.extract_strided_slice %175 {offsets = [0, 64], sizes = [8, 32], strides = [1, 1]} : vector<8x128xf32> to vector<8x32xf32>
    %189 = math.tanh %188 : vector<8x32xf32>
    %190 = vector.extract_strided_slice %175 {offsets = [0, 96], sizes = [8, 32], strides = [1, 1]} : vector<8x128xf32> to vector<8x32xf32>
    %191 = arith.negf %190 : vector<8x32xf32>
    %192 = math.exp %191 : vector<8x32xf32>
    %cst_58 = arith.constant 1.000000e+00 : f32
    %193 = vector.broadcast %cst_58 : f32 to vector<8x32xf32>
    %194 = arith.addf %193, %192 : vector<8x32xf32>
    %195 = arith.divf %193, %194 : vector<8x32xf32>
    %196 = arith.mulf %187, %138 : vector<8x32xf32>
    %197 = arith.mulf %181, %189 : vector<8x32xf32>
    %198 = arith.addf %196, %197 : vector<8x32xf32>
    %199 = math.tanh %198 : vector<8x32xf32>
    %200 = arith.mulf %195, %199 : vector<8x32xf32>
    %201 = vector.extract_strided_slice %9 {offsets = [24, 0], sizes = [8, 128], strides = [1, 1]} : vector<32x128xf32> to vector<8x128xf32>
    %202 = arith.truncf %170 : vector<8x32xf32> to vector<8x32xbf16>
    %c0_59 = arith.constant 0 : index
    %c0_60 = arith.constant 0 : index
    %203 = vector.load %arg7[%c0_59, %c0_60] : memref<32x128xbf16, #tpu.memory_space<vmem>>, vector<32x128xbf16>
    %cst_61 = arith.constant dense<0.000000e+00> : vector<8x128xf32>
    %204 = tpu.matmul %202, %203, %cst_61 {dimension_numbers = #tpu.dot_dimension_numbers<[1], [0], [0], [1], [0, 0, 1, 1], [], []>} : vector<8x32xbf16>, vector<32x128xbf16>, vector<8x128xf32> -> vector<8x128xf32>
    %205 = arith.addf %201, %204 : vector<8x128xf32>
    %206 = vector.extract_strided_slice %205 {offsets = [0, 0], sizes = [8, 32], strides = [1, 1]} : vector<8x128xf32> to vector<8x32xf32>
    %207 = arith.negf %206 : vector<8x32xf32>
    %208 = math.exp %207 : vector<8x32xf32>
    %cst_62 = arith.constant 1.000000e+00 : f32
    %209 = vector.broadcast %cst_62 : f32 to vector<8x32xf32>
    %210 = arith.addf %209, %208 : vector<8x32xf32>
    %211 = arith.divf %209, %210 : vector<8x32xf32>
    %212 = vector.extract_strided_slice %205 {offsets = [0, 32], sizes = [8, 32], strides = [1, 1]} : vector<8x128xf32> to vector<8x32xf32>
    %213 = arith.negf %212 : vector<8x32xf32>
    %214 = math.exp %213 : vector<8x32xf32>
    %cst_63 = arith.constant 1.000000e+00 : f32
    %215 = vector.broadcast %cst_63 : f32 to vector<8x32xf32>
    %216 = arith.addf %215, %214 : vector<8x32xf32>
    %217 = arith.divf %215, %216 : vector<8x32xf32>
    %218 = vector.extract_strided_slice %205 {offsets = [0, 64], sizes = [8, 32], strides = [1, 1]} : vector<8x128xf32> to vector<8x32xf32>
    %219 = math.tanh %218 : vector<8x32xf32>
    %220 = vector.extract_strided_slice %205 {offsets = [0, 96], sizes = [8, 32], strides = [1, 1]} : vector<8x128xf32> to vector<8x32xf32>
    %221 = arith.negf %220 : vector<8x32xf32>
    %222 = math.exp %221 : vector<8x32xf32>
    %cst_64 = arith.constant 1.000000e+00 : f32
    %223 = vector.broadcast %cst_64 : f32 to vector<8x32xf32>
    %224 = arith.addf %223, %222 : vector<8x32xf32>
    %225 = arith.divf %223, %224 : vector<8x32xf32>
    %226 = arith.mulf %217, %168 : vector<8x32xf32>
    %227 = arith.mulf %211, %219 : vector<8x32xf32>
    %228 = arith.addf %226, %227 : vector<8x32xf32>
    %229 = math.tanh %228 : vector<8x32xf32>
    %230 = arith.mulf %225, %229 : vector<8x32xf32>
    %231 = vector.extract_strided_slice %16 {offsets = [0, 0], sizes = [8, 128], strides = [1, 1]} : vector<32x128xf32> to vector<8x128xf32>
    %232 = arith.truncf %200 : vector<8x32xf32> to vector<8x32xbf16>
    %c0_65 = arith.constant 0 : index
    %c0_66 = arith.constant 0 : index
    %233 = vector.load %arg8[%c0_65, %c0_66] : memref<32x128xbf16, #tpu.memory_space<vmem>>, vector<32x128xbf16>
    %cst_67 = arith.constant dense<0.000000e+00> : vector<8x128xf32>
    %234 = tpu.matmul %232, %233, %cst_67 {dimension_numbers = #tpu.dot_dimension_numbers<[1], [0], [0], [1], [0, 0, 1, 1], [], []>} : vector<8x32xbf16>, vector<32x128xbf16>, vector<8x128xf32> -> vector<8x128xf32>
    %235 = arith.addf %231, %234 : vector<8x128xf32>
    %236 = vector.extract_strided_slice %235 {offsets = [0, 0], sizes = [8, 32], strides = [1, 1]} : vector<8x128xf32> to vector<8x32xf32>
    %237 = arith.negf %236 : vector<8x32xf32>
    %238 = math.exp %237 : vector<8x32xf32>
    %cst_68 = arith.constant 1.000000e+00 : f32
    %239 = vector.broadcast %cst_68 : f32 to vector<8x32xf32>
    %240 = arith.addf %239, %238 : vector<8x32xf32>
    %241 = arith.divf %239, %240 : vector<8x32xf32>
    %242 = vector.extract_strided_slice %235 {offsets = [0, 32], sizes = [8, 32], strides = [1, 1]} : vector<8x128xf32> to vector<8x32xf32>
    %243 = arith.negf %242 : vector<8x32xf32>
    %244 = math.exp %243 : vector<8x32xf32>
    %cst_69 = arith.constant 1.000000e+00 : f32
    %245 = vector.broadcast %cst_69 : f32 to vector<8x32xf32>
    %246 = arith.addf %245, %244 : vector<8x32xf32>
    %247 = arith.divf %245, %246 : vector<8x32xf32>
    %248 = vector.extract_strided_slice %235 {offsets = [0, 64], sizes = [8, 32], strides = [1, 1]} : vector<8x128xf32> to vector<8x32xf32>
    %249 = math.tanh %248 : vector<8x32xf32>
    %250 = vector.extract_strided_slice %235 {offsets = [0, 96], sizes = [8, 32], strides = [1, 1]} : vector<8x128xf32> to vector<8x32xf32>
    %251 = arith.negf %250 : vector<8x32xf32>
    %252 = math.exp %251 : vector<8x32xf32>
    %cst_70 = arith.constant 1.000000e+00 : f32
    %253 = vector.broadcast %cst_70 : f32 to vector<8x32xf32>
    %254 = arith.addf %253, %252 : vector<8x32xf32>
    %255 = arith.divf %253, %254 : vector<8x32xf32>
    %256 = arith.mulf %247, %198 : vector<8x32xf32>
    %257 = arith.mulf %241, %249 : vector<8x32xf32>
    %258 = arith.addf %256, %257 : vector<8x32xf32>
    %259 = math.tanh %258 : vector<8x32xf32>
    %260 = arith.mulf %255, %259 : vector<8x32xf32>
    %c0_71 = arith.constant 0 : index
    %c0_72 = arith.constant 0 : index
    %261 = vector.load %arg13[%c0_71, %c0_72] : memref<8x32xf32, #tpu.memory_space<vmem>>, vector<8x32xf32>
    tpu.vector_store %arg13[%c0_71, %c0_72], %230 {strides = array<i32>} : memref<8x32xf32, #tpu.memory_space<vmem>>, vector<8x32xf32>,
    %c0_73 = arith.constant 0 : index
    %c0_74 = arith.constant 0 : index
    %262 = vector.load %arg14[%c0_73, %c0_74] : memref<8x32xf32, #tpu.memory_space<vmem>>, vector<8x32xf32>
    tpu.vector_store %arg14[%c0_73, %c0_74], %228 {strides = array<i32>} : memref<8x32xf32, #tpu.memory_space<vmem>>, vector<8x32xf32>,
    %c0_75 = arith.constant 0 : index
    %c0_76 = arith.constant 0 : index
    %263 = vector.load %arg15[%c0_75, %c0_76] : memref<8x32xf32, #tpu.memory_space<vmem>>, vector<8x32xf32>
    tpu.vector_store %arg15[%c0_75, %c0_76], %260 {strides = array<i32>} : memref<8x32xf32, #tpu.memory_space<vmem>>, vector<8x32xf32>,
    %c0_77 = arith.constant 0 : index
    %c0_78 = arith.constant 0 : index
    %264 = vector.load %arg16[%c0_77, %c0_78] : memref<8x32xf32, #tpu.memory_space<vmem>>, vector<8x32xf32>
    tpu.vector_store %arg16[%c0_77, %c0_78], %258 {strides = array<i32>} : memref<8x32xf32, #tpu.memory_space<vmem>>, vector<8x32xf32>,
    %c1_i32 = arith.constant 1 : i32
    %265 = arith.cmpi eq, %arg0, %c1_i32 : i32
    %266 = arith.extui %265 : i1 to i32
    %c0_i32_79 = arith.constant 0 : i32
    %267 = arith.cmpi ne, %266, %c0_i32_79 : i32
    scf.if %267 {
      %268 = arith.truncf %230 : vector<8x32xf32> to vector<8x32xbf16>
      %c0_80 = arith.constant 0 : index
      %c0_81 = arith.constant 0 : index
      %269 = vector.load %arg9[%c0_80, %c0_81] : memref<32x4xbf16, #tpu.memory_space<vmem>>, vector<32x4xbf16>
      %cst_82 = arith.constant dense<0.000000e+00> : vector<8x4xf32>
      %270 = tpu.matmul %268, %269, %cst_82 {dimension_numbers = #tpu.dot_dimension_numbers<[1], [0], [0], [1], [0, 0, 1, 1], [], []>} : vector<8x32xbf16>, vector<32x4xbf16>, vector<8x4xf32> -> vector<8x4xf32>
      %271 = arith.truncf %260 : vector<8x32xf32> to vector<8x32xbf16>
      %c0_83 = arith.constant 0 : index
      %c0_84 = arith.constant 0 : index
      %272 = vector.load %arg10[%c0_83, %c0_84] : memref<32x4xbf16, #tpu.memory_space<vmem>>, vector<32x4xbf16>
      %cst_85 = arith.constant dense<0.000000e+00> : vector<8x4xf32>
      %273 = tpu.matmul %271, %272, %cst_85 {dimension_numbers = #tpu.dot_dimension_numbers<[1], [0], [0], [1], [0, 0, 1, 1], [], []>} : vector<8x32xbf16>, vector<32x4xbf16>, vector<8x4xf32> -> vector<8x4xf32>
      %274 = arith.addf %270, %273 : vector<8x4xf32>
      %c0_86 = arith.constant 0 : index
      %c0_87 = arith.constant 0 : index
      %275 = vector.load %arg11[%c0_86, %c0_87] : memref<1x4xf32, #tpu.memory_space<vmem>>, vector<1x4xf32>
      %276 = vector.broadcast %275 : vector<1x4xf32> to vector<8x4xf32>
      %277 = arith.addf %274, %276 : vector<8x4xf32>
      %c0_88 = arith.constant 0 : index
      %c0_89 = arith.constant 0 : index
      %278 = vector.load %arg12[%c0_88, %c0_89] : memref<8x4xf32, #tpu.memory_space<vmem>>, vector<8x4xf32>
      tpu.vector_store %arg12[%c0_88, %c0_89], %277 {strides = array<i32>} : memref<8x4xf32, #tpu.memory_space<vmem>>, vector<8x4xf32>,
    } else {
    }
    return
  }
  func.func @transform_0(%arg0: i32) -> (i32, i32, i32) {
    %c0_i32 = arith.constant 0 : i32
    %c0_i32_0 = arith.constant 0 : i32
    %c0_i32_1 = arith.constant 0 : i32
    return %arg0, %c0_i32, %c0_i32_0 : i32, i32, i32
  }
  func.func @transform_1(%arg0: i32) -> (i32, i32, i32) {
    %c1_i32 = arith.constant 1 : i32
    %0 = arith.subi %c1_i32, %arg0 : i32
    %c0_i32 = arith.constant 0 : i32
    %c0_i32_0 = arith.constant 0 : i32
    %c0_i32_1 = arith.constant 0 : i32
    return %0, %c0_i32, %c0_i32_0 : i32, i32, i32
  }
  func.func @transform_2(%arg0: i32) -> (i32, i32) {
    %c0_i32 = arith.constant 0 : i32
    %c0_i32_0 = arith.constant 0 : i32
    %c0_i32_1 = arith.constant 0 : i32
    return %c0_i32, %c0_i32_0 : i32, i32
  }
  func.func @transform_3(%arg0: i32) -> (i32, i32) {
    %c0_i32 = arith.constant 0 : i32
    %c0_i32_0 = arith.constant 0 : i32
    %c0_i32_1 = arith.constant 0 : i32
    return %c0_i32, %c0_i32_0 : i32, i32
  }
  func.func @transform_4(%arg0: i32) -> (i32, i32) {
    %c0_i32 = arith.constant 0 : i32
    %c0_i32_0 = arith.constant 0 : i32
    %c0_i32_1 = arith.constant 0 : i32
    return %c0_i32, %c0_i32_0 : i32, i32
  }
  func.func @transform_5(%arg0: i32) -> (i32, i32) {
    %c0_i32 = arith.constant 0 : i32
    %c0_i32_0 = arith.constant 0 : i32
    %c0_i32_1 = arith.constant 0 : i32
    return %c0_i32, %c0_i32_0 : i32, i32
  }
  func.func @transform_6(%arg0: i32) -> (i32, i32) {
    %c0_i32 = arith.constant 0 : i32
    %c0_i32_0 = arith.constant 0 : i32
    %c0_i32_1 = arith.constant 0 : i32
    return %c0_i32, %c0_i32_0 : i32, i32
  }
  func.func @transform_7(%arg0: i32) -> (i32, i32) {
    %c0_i32 = arith.constant 0 : i32
    %c0_i32_0 = arith.constant 0 : i32
    %c0_i32_1 = arith.constant 0 : i32
    return %c0_i32, %c0_i32_0 : i32, i32
  }
  func.func @transform_8(%arg0: i32) -> (i32, i32) {
    %c0_i32 = arith.constant 0 : i32
    %c0_i32_0 = arith.constant 0 : i32
    %c0_i32_1 = arith.constant 0 : i32
    return %c0_i32, %c0_i32_0 : i32, i32
  }
  func.func @transform_9(%arg0: i32) -> (i32, i32) {
    %c0_i32 = arith.constant 0 : i32
    %c0_i32_0 = arith.constant 0 : i32
    %c0_i32_1 = arith.constant 0 : i32
    return %c0_i32, %c0_i32_0 : i32, i32
  }
  func.func @transform_10(%arg0: i32) -> (i32, i32) {
    %c0_i32 = arith.constant 0 : i32
    %c0_i32_0 = arith.constant 0 : i32
    %c0_i32_1 = arith.constant 0 : i32
    return %c0_i32, %c0_i32_0 : i32, i32
  }
  func.func @transform_11(%arg0: i32) -> (i32, i32) {
    %c0_i32 = arith.constant 0 : i32
    %c0_i32_0 = arith.constant 0 : i32
    %c0_i32_1 = arith.constant 0 : i32
    return %c0_i32, %c0_i32_0 : i32, i32
  }
}

</mosaic_0001>

<llo_original>
// kernel: classifier_forward.1
$region0: #{classifier_forward.1}
  #allocation0 [shape = 'u32[]', space=smem, size = 0x4, offset = 0x4, fixed_abs, tag = 'smem constant byte address 0x4 - core index']
  #allocation1 [shape = 'u32[72,128]{1,0:T(1,128)}', space=vmem, size = 0x9000, scoped, tag = 'internal scratch']
  #allocation2 [shape = 'f32[8,32]{1,0:T(8,128)}', space=vmem, size = 0x1000, scoped, tag = 'scratch operand']
  #allocation3 [shape = 'f32[8,32]{1,0:T(8,128)}', space=vmem, size = 0x1000, scoped, tag = 'scratch operand']
  #allocation4 [shape = 'f32[8,32]{1,0:T(8,128)}', space=vmem, size = 0x1000, scoped, tag = 'scratch operand']
  #allocation5 [shape = 'f32[8,32]{1,0:T(8,128)}', space=vmem, size = 0x1000, scoped, tag = 'scratch operand']
  %s0 = inlined_call_operand.vmem [shape: bf16[2,32,32], index: 0, kind: input, shape index: {}, may-alias: {0,1}]
  %s1 = inlined_call_operand.vmem [shape: bf16[2,32,32], index: 1, kind: input, shape index: {}, may-alias: {0,1}]
  %s2 = inlined_call_operand.vmem [shape: bf16[32,128], index: 2, kind: input, shape index: {}]
  %s3 = inlined_call_operand.vmem [shape: bf16[32,128], index: 3, kind: input, shape index: {}]
  %s4 = inlined_call_operand.vmem [shape: f32[1,128], index: 4, kind: input, shape index: {}]
  %s5 = inlined_call_operand.vmem [shape: f32[1,128], index: 5, kind: input, shape index: {}]
  %s6 = inlined_call_operand.vmem [shape: bf16[32,128], index: 6, kind: input, shape index: {}]
  %s7 = inlined_call_operand.vmem [shape: bf16[32,128], index: 7, kind: input, shape index: {}]
  %s8 = inlined_call_operand.vmem [shape: bf16[32,4], index: 8, kind: input, shape index: {}]
  %s9 = inlined_call_operand.vmem [shape: bf16[32,4], index: 9, kind: input, shape index: {}]
  %s10 = inlined_call_operand.vmem [shape: f32[1,4], index: 10, kind: input, shape index: {}]
  %s11 = inlined_call_operand.vmem [shape: f32[8,4], index: 11, kind: output, shape index: {}]
  %s12 = sld [smem:[#allocation0]]
  $region85: #{classifier_forward.1} parent=0
    _
  %s14 = ssub.s32 1, %s12
  %s15 = scalar_select 0, %s14, %s12
  loop: start=0, step=1, limit=4
  $region2: #{classifier_forward.1} parent=0 // loop_pre_header
    _
  $region3: #{classifier_forward.1} parent=0 // loop_header
    %s17 = sphi 0, %s21
    %p18 = scmp.ge.s32.totalorder %s17, 4
    %s27 = sphi 0, %s29
    %s30 = sphi 0, %s27
    %s31 = sphi 0, %s30
    %s47 = sphi 0, %s31
    %s55 = sphi 0, %s57
    %s58 = sphi 0, %s55
    %s59 = sphi 0, %s58
    %s75 = sphi 0, %s59
    %s79 = sphi 0, %s79
    %s81 = sphi 0, %s79
    %s82 = sphi 0, %s81
    %s96 = sphi 0, %s82
    %s100 = sphi 0, %s100
    %s102 = sphi 0, %s100
    %s103 = sphi 0, %s102
    %s117 = sphi 0, %s103
    %s121 = sphi 0, %s121
    %s123 = sphi 0, %s121
    %s124 = sphi 0, %s123
    %s138 = sphi 0, %s124
    %s142 = sphi 0, %s142
    %s144 = sphi 0, %s142
    %s145 = sphi 0, %s144
    %s159 = sphi 0, %s145
    %s163 = sphi 0, %s163
    %s165 = sphi 0, %s163
    %s166 = sphi 0, %s165
    %s180 = sphi 0, %s166
    %s184 = sphi 0, %s184
    %s186 = sphi 0, %s184
    %s187 = sphi 0, %s186
    %s201 = sphi 0, %s187
    %s205 = sphi 0, %s205
    %s207 = sphi 0, %s205
    %s208 = sphi 0, %s207
    %s222 = sphi 0, %s208
    %s226 = sphi 0, %s226
    %s228 = sphi 0, %s226
    %s229 = sphi 0, %s228
    %s243 = sphi 0, %s229
    %s247 = sphi 0, %s247
    %s249 = sphi 0, %s247
    %s250 = sphi 0, %s249
    %s264 = sphi 0, %s250
    %s268 = sphi 0, %s268
    %s270 = sphi 0, %s268
    %s271 = sphi 0, %s270
    %s285 = sphi 0, %s271
  $region4: #{classifier_forward.1} parent=0 // loop_header_branch
    %20 = sbr.rel (%p18) target = $region8
  $region5: #{classifier_forward.1} parent=0 // loop_body
    %s22 = ssub.s32 %s17, 1
    %s23 = ssub.s32 %s17, 2
    %s24 = sadd.s32 %s17, 1
    %s25 = ssub.s32 %s17, %s24
    %p26 = scmp.eq.s32.totalorder %s25, 0
    %s28 = sadd.s32 %s27, 1
    %s29 = scalar_select %p26, %s27, %s28
    %p32 = pneg %p26
    %p33 = scmp.eq.s32.totalorder %s17, 1
    %p34 = por %p32, %p33
    %p35 = scmp.ne.s32.totalorder %s27, %s30
    %p36 = scmp.eq.s32.totalorder %s17, 0
    %p37 = por %p35, %p36
    %p38 = scmp.ne.s32.totalorder %s27, %s30
    %p39 = scmp.eq.s32.totalorder %s22, 1
    %p40 = por %p38, %p39
    %p41 = scmp.ne.s32.totalorder %s30, %s31
    %p42 = scmp.eq.s32.totalorder %s22, 0
    %p43 = por %p41, %p42
    %p44 = scmp.ne.s32.totalorder %s30, %s31
    %p45 = scmp.eq.s32.totalorder %s23, 1
    %p46 = por %p44, %p45
    %p48 = scmp.ne.s32.totalorder %s31, %s47
    %p49 = scmp.eq.s32.totalorder %s23, 0
    %p50 = por %p48, %p49
    %s51 = ssub.s32 1, %s17
    %s52 = ssub.s32 1, %s24
    %s53 = ssub.s32 %s51, %s52
    %p54 = scmp.eq.s32.totalorder %s53, 0
    %s56 = sadd.s32 %s55, 1
    %s57 = scalar_select %p54, %s55, %s56
    %p60 = pneg %p54
    %p61 = scmp.eq.s32.totalorder %s17, 1
    %p62 = por %p60, %p61
    %p63 = scmp.ne.s32.totalorder %s55, %s58
    %p64 = scmp.eq.s32.totalorder %s17, 0
    %p65 = por %p63, %p64
    %p66 = scmp.ne.s32.totalorder %s55, %s58
    %p67 = scmp.eq.s32.totalorder %s22, 1
    %p68 = por %p66, %p67
    %p69 = scmp.ne.s32.totalorder %s58, %s59
    %p70 = scmp.eq.s32.totalorder %s22, 0
    %p71 = por %p69, %p70
    %p72 = scmp.ne.s32.totalorder %s58, %s59
    %p73 = scmp.eq.s32.totalorder %s23, 1
    %p74 = por %p72, %p73
    %p76 = scmp.ne.s32.totalorder %s59, %s75
    %p77 = scmp.eq.s32.totalorder %s23, 0
    %p78 = por %p76, %p77
    %s80 = sadd.s32 %s79, 1
    %p83 = scmp.eq.s32.totalorder %s17, 1
    %p84 = scmp.ne.s32.totalorder %s79, %s81
    %p85 = scmp.eq.s32.totalorder %s17, 0
    %p86 = por %p84, %p85
    %p87 = scmp.ne.s32.totalorder %s79, %s81
    %p88 = scmp.eq.s32.totalorder %s22, 1
    %p89 = por %p87, %p88
    %p90 = scmp.ne.s32.totalorder %s81, %s82
    %p91 = scmp.eq.s32.totalorder %s22, 0
    %p92 = por %p90, %p91
    %p93 = scmp.ne.s32.totalorder %s81, %s82
    %p94 = scmp.eq.s32.totalorder %s23, 1
    %p95 = por %p93, %p94
    %p97 = scmp.ne.s32.totalorder %s82, %s96
    %p98 = scmp.eq.s32.totalorder %s23, 0
    %p99 = por %p97, %p98
    %s101 = sadd.s32 %s100, 1
    %p104 = scmp.eq.s32.totalorder %s17, 1
    %p105 = scmp.ne.s32.totalorder %s100, %s102
    %p106 = scmp.eq.s32.totalorder %s17, 0
    %p107 = por %p105, %p106
    %p108 = scmp.ne.s32.totalorder %s100, %s102
    %p109 = scmp.eq.s32.totalorder %s22, 1
    %p110 = por %p108, %p109
    %p111 = scmp.ne.s32.totalorder %s102, %s103
    %p112 = scmp.eq.s32.totalorder %s22, 0
    %p113 = por %p111, %p112
    %p114 = scmp.ne.s32.totalorder %s102, %s103
    %p115 = scmp.eq.s32.totalorder %s23, 1
    %p116 = por %p114, %p115
    %p118 = scmp.ne.s32.totalorder %s103, %s117
    %p119 = scmp.eq.s32.totalorder %s23, 0
    %p120 = por %p118, %p119
    %s122 = sadd.s32 %s121, 1
    %p125 = scmp.eq.s32.totalorder %s17, 1
    %p126 = scmp.ne.s32.totalorder %s121, %s123
    %p127 = scmp.eq.s32.totalorder %s17, 0
    %p128 = por %p126, %p127
    %p129 = scmp.ne.s32.totalorder %s121, %s123
    %p130 = scmp.eq.s32.totalorder %s22, 1
    %p131 = por %p129, %p130
    %p132 = scmp.ne.s32.totalorder %s123, %s124
    %p133 = scmp.eq.s32.totalorder %s22, 0
    %p134 = por %p132, %p133
    %p135 = scmp.ne.s32.totalorder %s123, %s124
    %p136 = scmp.eq.s32.totalorder %s23, 1
    %p137 = por %p135, %p136
    %p139 = scmp.ne.s32.totalorder %s124, %s138
    %p140 = scmp.eq.s32.totalorder %s23, 0
    %p141 = por %p139, %p140
    %s143 = sadd.s32 %s142, 1
    %p146 = scmp.eq.s32.totalorder %s17, 1
    %p147 = scmp.ne.s32.totalorder %s142, %s144
    %p148 = scmp.eq.s32.totalorder %s17, 0
    %p149 = por %p147, %p148
    %p150 = scmp.ne.s32.totalorder %s142, %s144
    %p151 = scmp.eq.s32.totalorder %s22, 1
    %p152 = por %p150, %p151
    %p153 = scmp.ne.s32.totalorder %s144, %s145
    %p154 = scmp.eq.s32.totalorder %s22, 0
    %p155 = por %p153, %p154
    %p156 = scmp.ne.s32.totalorder %s144, %s145
    %p157 = scmp.eq.s32.totalorder %s23, 1
    %p158 = por %p156, %p157
    %p160 = scmp.ne.s32.totalorder %s145, %s159
    %p161 = scmp.eq.s32.totalorder %s23, 0
    %p162 = por %p160, %p161
    %s164 = sadd.s32 %s163, 1
    %p167 = scmp.eq.s32.totalorder %s17, 1
    %p168 = scmp.ne.s32.totalorder %s163, %s165
    %p169 = scmp.eq.s32.totalorder %s17, 0
    %p170 = por %p168, %p169
    %p171 = scmp.ne.s32.totalorder %s163, %s165
    %p172 = scmp.eq.s32.totalorder %s22, 1
    %p173 = por %p171, %p172
    %p174 = scmp.ne.s32.totalorder %s165, %s166
    %p175 = scmp.eq.s32.totalorder %s22, 0
    %p176 = por %p174, %p175
    %p177 = scmp.ne.s32.totalorder %s165, %s166
    %p178 = scmp.eq.s32.totalorder %s23, 1
    %p179 = por %p177, %p178
    %p181 = scmp.ne.s32.totalorder %s166, %s180
    %p182 = scmp.eq.s32.totalorder %s23, 0
    %p183 = por %p181, %p182
    %s185 = sadd.s32 %s184, 1
    %p188 = scmp.eq.s32.totalorder %s17, 1
    %p189 = scmp.ne.s32.totalorder %s184, %s186
    %p190 = scmp.eq.s32.totalorder %s17, 0
    %p191 = por %p189, %p190
    %p192 = scmp.ne.s32.totalorder %s184, %s186
    %p193 = scmp.eq.s32.totalorder %s22, 1
    %p194 = por %p192, %p193
    %p195 = scmp.ne.s32.totalorder %s186, %s187
    %p196 = scmp.eq.s32.totalorder %s22, 0
    %p197 = por %p195, %p196
    %p198 = scmp.ne.s32.totalorder %s186, %s187
    %p199 = scmp.eq.s32.totalorder %s23, 1
    %p200 = por %p198, %p199
    %p202 = scmp.ne.s32.totalorder %s187, %s201
    %p203 = scmp.eq.s32.totalorder %s23, 0
    %p204 = por %p202, %p203
    %s206 = sadd.s32 %s205, 1
    %p209 = scmp.eq.s32.totalorder %s17, 1
    %p210 = scmp.ne.s32.totalorder %s205, %s207
    %p211 = scmp.eq.s32.totalorder %s17, 0
    %p212 = por %p210, %p211
    %p213 = scmp.ne.s32.totalorder %s205, %s207
    %p214 = scmp.eq.s32.totalorder %s22, 1
    %p215 = por %p213, %p214
    %p216 = scmp.ne.s32.totalorder %s207, %s208
    %p217 = scmp.eq.s32.totalorder %s22, 0
    %p218 = por %p216, %p217
    %p219 = scmp.ne.s32.totalorder %s207, %s208
    %p220 = scmp.eq.s32.totalorder %s23, 1
    %p221 = por %p219, %p220
    %p223 = scmp.ne.s32.totalorder %s208, %s222
    %p224 = scmp.eq.s32.totalorder %s23, 0
    %p225 = por %p223, %p224
    %s227 = sadd.s32 %s226, 1
    %p230 = scmp.eq.s32.totalorder %s17, 1
    %p231 = scmp.ne.s32.totalorder %s226, %s228
    %p232 = scmp.eq.s32.totalorder %s17, 0
    %p233 = por %p231, %p232
    %p234 = scmp.ne.s32.totalorder %s226, %s228
    %p235 = scmp.eq.s32.totalorder %s22, 1
    %p236 = por %p234, %p235
    %p237 = scmp.ne.s32.totalorder %s228, %s229
    %p238 = scmp.eq.s32.totalorder %s22, 0
    %p239 = por %p237, %p238
    %p240 = scmp.ne.s32.totalorder %s228, %s229
    %p241 = scmp.eq.s32.totalorder %s23, 1
    %p242 = por %p240, %p241
    %p244 = scmp.ne.s32.totalorder %s229, %s243
    %p245 = scmp.eq.s32.totalorder %s23, 0
    %p246 = por %p244, %p245
    %s248 = sadd.s32 %s247, 1
    %p251 = scmp.eq.s32.totalorder %s17, 1
    %p252 = scmp.ne.s32.totalorder %s247, %s249
    %p253 = scmp.eq.s32.totalorder %s17, 0
    %p254 = por %p252, %p253
    %p255 = scmp.ne.s32.totalorder %s247, %s249
    %p256 = scmp.eq.s32.totalorder %s22, 1
    %p257 = por %p255, %p256
    %p258 = scmp.ne.s32.totalorder %s249, %s250
    %p259 = scmp.eq.s32.totalorder %s22, 0
    %p260 = por %p258, %p259
    %p261 = scmp.ne.s32.totalorder %s249, %s250
    %p262 = scmp.eq.s32.totalorder %s23, 1
    %p263 = por %p261, %p262
    %p265 = scmp.ne.s32.totalorder %s250, %s264
    %p266 = scmp.eq.s32.totalorder %s23, 0
    %p267 = por %p265, %p266
    %s269 = sadd.s32 %s268, 1
    %p272 = scmp.eq.s32.totalorder %s17, 1
    %p273 = scmp.ne.s32.totalorder %s268, %s270
    %p274 = scmp.eq.s32.totalorder %s17, 0
    %p275 = por %p273, %p274
    %p276 = scmp.ne.s32.totalorder %s268, %s270
    %p277 = scmp.eq.s32.totalorder %s22, 1
    %p278 = por %p276, %p277
    %p279 = scmp.ne.s32.totalorder %s270, %s271
    %p280 = scmp.eq.s32.totalorder %s22, 0
    %p281 = por %p279, %p280
    %p282 = scmp.ne.s32.totalorder %s270, %s271
    %p283 = scmp.eq.s32.totalorder %s23, 1
    %p284 = por %p282, %p283
    %p286 = scmp.ne.s32.totalorder %s271, %s285
    %p287 = scmp.eq.s32.totalorder %s23, 0
    %p288 = por %p286, %p287
    %p289 = scmp.le.s32.totalorder 1, %s17
    %p290 = scmp.lt.s32.totalorder %s17, 3
    %p291 = pnand %p289, %p290
    %p292 = pneg %p291
    // Predicated region
    $region9: #{classifier_forward.1} parent=5 // pred_check
      _
    $region10: #{classifier_forward.1} parent=5 // pred_check_branch
      %294 = sbr.rel (%p291) target = $region12
    $region11: #{classifier_forward.1} parent=5 // pred_region
      %s295 = ssub.s32 %s17, 1
      // Predicated region
      $region13: #{classifier_forward.1} parent=11 // pred_check
        %p296 = pneg %p92
      $region14: #{classifier_forward.1} parent=11 // pred_check_branch
        %298 = sbr.rel (%p296) target = $region16
      $region15: #{classifier_forward.1} parent=11 // pred_region
        _
      $region16: #{classifier_forward.1} parent=11 // pred_fallthru
        _
      // Predicated region
      $region17: #{classifier_forward.1} parent=11 // pred_check
        %p299 = pneg %p113
      $region18: #{classifier_forward.1} parent=11 // pred_check_branch
        %301 = sbr.rel (%p299) target = $region20
      $region19: #{classifier_forward.1} parent=11 // pred_region
        _
      $region20: #{classifier_forward.1} parent=11 // pred_fallthru
        _
      // Predicated region
      $region21: #{classifier_forward.1} parent=11 // pred_check
        %p302 = pneg %p134
      $region22: #{classifier_forward.1} parent=11 // pred_check_branch
        %304 = sbr.rel (%p302) target = $region24
      $region23: #{classifier_forward.1} parent=11 // pred_region
        _
      $region24: #{classifier_forward.1} parent=11 // pred_fallthru
        _
      // Predicated region
      $region25: #{classifier_forward.1} parent=11 // pred_check
        %p305 = pneg %p155
      $region26: #{classifier_forward.1} parent=11 // pred_check_branch
        %307 = sbr.rel (%p305) target = $region28
      $region27: #{classifier_forward.1} parent=11 // pred_region
        _
      $region28: #{classifier_forward.1} parent=11 // pred_fallthru
        _
      // Predicated region
      $region29: #{classifier_forward.1} parent=11 // pred_check
        %p308 = pneg %p176
      $region30: #{classifier_forward.1} parent=11 // pred_check_branch
        %310 = sbr.rel (%p308) target = $region32
      $region31: #{classifier_forward.1} parent=11 // pred_region
        _
      $region32: #{classifier_forward.1} parent=11 // pred_fallthru
        _
      // Predicated region
      $region33: #{classifier_forward.1} parent=11 // pred_check
        %p311 = pneg %p197
      $region34: #{classifier_forward.1} parent=11 // pred_check_branch
        %313 = sbr.rel (%p311) target = $region36
      $region35: #{classifier_forward.1} parent=11 // pred_region
        _
      $region36: #{classifier_forward.1} parent=11 // pred_fallthru
        _
      // Predicated region
      $region37: #{classifier_forward.1} parent=11 // pred_check
        %p314 = pneg %p218
      $region38: #{classifier_forward.1} parent=11 // pred_check_branch
        %316 = sbr.rel (%p314) target = $region40
      $region39: #{classifier_forward.1} parent=11 // pred_region
        _
      $region40: #{classifier_forward.1} parent=11 // pred_fallthru
        _
      // Predicated region
      $region41: #{classifier_forward.1} parent=11 // pred_check
        %p317 = pneg %p239
      $region42: #{classifier_forward.1} parent=11 // pred_check_branch
        %319 = sbr.rel (%p317) target = $region44
      $region43: #{classifier_forward.1} parent=11 // pred_region
        _
      $region44: #{classifier_forward.1} parent=11 // pred_fallthru
        _
      // Predicated region
      $region45: #{classifier_forward.1} parent=11 // pred_check
        %p320 = pneg %p260
      $region46: #{classifier_forward.1} parent=11 // pred_check_branch
        %322 = sbr.rel (%p320) target = $region48
      $region47: #{classifier_forward.1} parent=11 // pred_region
        _
      $region48: #{classifier_forward.1} parent=11 // pred_fallthru
        _
    $region12: #{classifier_forward.1} parent=5 // pred_fallthru
      _
    %p323 = scmp.lt.s32.totalorder %s17, 2
    // Predicated region
    $region49: #{classifier_forward.1} parent=5 // pred_check
      %p324 = pneg %p323
    $region50: #{classifier_forward.1} parent=5 // pred_check_branch
      %326 = sbr.rel (%p324) target = $region52
    $region51: #{classifier_forward.1} parent=5 // pred_region
      // Predicated region
      $region53: #{classifier_forward.1} parent=51 // pred_check
        %p327 = pneg %p37
      $region54: #{classifier_forward.1} parent=51 // pred_check_branch
        %329 = sbr.rel (%p327) target = $region56
      $region55: #{classifier_forward.1} parent=51 // pred_region
        %p330 = scmp.lt.s32.totalorder %s17, 1
        %s331 = scalar_select %p330, %s17, 1
        %s332 = smul.addr %s331, 4
        %s333 = smul.addr %s332, 4
        %s334 = scalar_lea.vmem %s0, %s333
      $region56: #{classifier_forward.1} parent=51 // pred_fallthru
        _
      // Predicated region
      $region57: #{classifier_forward.1} parent=51 // pred_check
        %p335 = pneg %p65
      $region58: #{classifier_forward.1} parent=51 // pred_check_branch
        %337 = sbr.rel (%p335) target = $region60
      $region59: #{classifier_forward.1} parent=51 // pred_region
        %s338 = ssub.s32 1, %s17
        %p339 = scmp.lt.s32.totalorder %s338, 1
        %s340 = scalar_select %p339, %s338, 1
        %s341 = smul.addr %s340, 4
        %s342 = smul.addr %s341, 4
        %s343 = scalar_lea.vmem %s1, %s342
        %s344 = ssub.s32 1, %s17
      $region60: #{classifier_forward.1} parent=51 // pred_fallthru
        _
    $region52: #{classifier_forward.1} parent=5 // pred_fallthru
      _
    %p345 = scmp.le.s32.totalorder 1, %s17
    %p346 = scmp.lt.s32.totalorder %s17, 3
    %p347 = pnand %p345, %p346
    %p348 = pneg %p347
    // Predicated region
    $region61: #{classifier_forward.1} parent=5 // pred_check
      _
    $region62: #{classifier_forward.1} parent=5 // pred_check_branch
      %350 = sbr.rel (%p347) target = $region64
    $region63: #{classifier_forward.1} parent=5 // pred_region
      %s351 = ssub.s32 %s17, 1
      %p352 = scmp.lt.s32.totalorder %s22, 1
      %s353 = scalar_select %p352, %s22, 1
      %s354 = smul.addr %s353, 4
      %s355 = smul.addr %s354, 4
      %s356 = scalar_lea.vmem %s0, %s355
      %p357 = pneg %p43
      %p358 = pneg %p40
      %s359 = ssub.s32 1, %s22
      %p360 = scmp.lt.s32.totalorder %s359, 1
      %s361 = scalar_select %p360, %s359, 1
      %s362 = smul.addr %s361, 4
      %s363 = smul.addr %s362, 4
      %s364 = scalar_lea.vmem %s1, %s363
      %p365 = pneg %p71
      %p366 = pneg %p68
      %p367 = pneg %p92
      %p368 = pneg %p89
      %p369 = pneg %p113
      %p370 = pneg %p110
      %p371 = pneg %p134
      %p372 = pneg %p131
      %p373 = pneg %p155
      %p374 = pneg %p152
      %p375 = pneg %p176
      %p376 = pneg %p173
      %p377 = pneg %p197
      %p378 = pneg %p194
      %p379 = pneg %p218
      %p380 = pneg %p215
      %p381 = pneg %p239
      %p382 = pneg %p236
      %p383 = pneg %p260
      %p384 = pneg %p257
      %p385 = pneg %p281
      %p386 = pneg %p278
      %p387 = scmp.lt.s32.totalorder %s22, 1
      %s388 = scalar_select %p387, %s22, 1
      %s389 = smul.addr %s388, 4
      %s390 = smul.addr %s389, 4
      %s391 = scalar_lea.vmem %s0, %s390
      %s392 = ssub.s32 1, %s22
      %p393 = scmp.lt.s32.totalorder %s392, 1
      %s394 = scalar_select %p393, %s392, 1
      %s395 = smul.addr %s394, 4
      %s396 = smul.addr %s395, 4
      %s397 = scalar_lea.vmem %s1, %s396
      %s398 = ssub.s32 1, %s22
      %p400 = scmp.eq.s32.totalorder %s22, 0
      // Predicated region
      $region65: #{classifier_forward.1} parent=63 // pred_check
        %p401 = pneg %p400
      $region66: #{classifier_forward.1} parent=63 // pred_check_branch
        %403 = sbr.rel (%p401) target = $region68
      $region67: #{classifier_forward.1} parent=63 // pred_region
        %vm404 = vcmask 261120
        %405 = vst.msk [vmem:[#allocation2] sm:$0xff] %vm404, 0.0
        %406 = vst.msk [vmem:[#allocation3] sm:$0xff] %vm404, 0.0
        %407 = vst.msk [vmem:[#allocation4] sm:$0xff] %vm404, 0.0
        %408 = vst.msk [vmem:[#allocation5] sm:$0xff] %vm404, 0.0
      $region68: #{classifier_forward.1} parent=63 // pred_fallthru
        _
      %v409 = vld [vmem:[%s391] sm:$0xf]
      %v410 = vld [vmem:[%s391 + $0x4] sm:$0xf]
      %v411 = vld [vmem:[%s391 + $0x8] sm:$0xf]
      %v412 = vld [vmem:[%s391 + $0xc] sm:$0xf]
      %v413 = vld [vmem:[%s2] sm:$0xf]
      %v414 = vld [vmem:[%s2 + $0x4] sm:$0xf]
      %v415 = vld [vmem:[%s2 + $0x8] sm:$0xf]
      %v416 = vld [vmem:[%s2 + $0xc] sm:$0xf]
      %v417 = vld [vmem:[%s4] sm:$0x1]
      %v419 = vperm.slane %v417, 0
      %v425 = vunpack.c.l.b16 %v409
      %v426 = vunpack.c.l.b16 %v410
      %v427 = vunpack.c.l.b16 %v411
      %v428 = vunpack.c.l.b16 %v412
      %v429 = vpack.c.b16 %v426, %v425
      %v430 = vpack.c.b16 %v428, %v427
      %v435 = vunpack.c.l.b16 %v413
      %v436 = vunpack.c.l.b16 %v414
      %v437 = vunpack.c.l.b16 %v415
      %v438 = vunpack.c.l.b16 %v416
      %v439 = vpack.c.b16 %v436, %v435
      %v440 = vpack.c.b16 %v438, %v437
      %vm443 = vcmask 261120
      %v445 = vsel %vm443, %v429, 0
      %v448 = vsel %vm443, %v430, 0
      %450 = vmatpush.bf16.msra.mxu0 0
      %451 = vmatpush.bf16.msra.mxu0 0
      %452 = vmatpush.bf16.msra.mxu0 0
      %453 = vmatpush.bf16.msra.mxu0 0
      %454 = vmatpush.bf16.msra.mxu0 0
      %455 = vmatpush.bf16.msra.mxu0 0
      %456 = vmatpush.bf16.msra.mxu0 %v440
      %457 = vmatpush.bf16.msra.mxu0 %v439
      %458 = vmatmul.bf16.gmra.mxu0 %v445
      %v459 = vpop.f32.mrf.mxu0
      %v460 = vadd.f32 %v419, %v459
      %v461 = vpop.f32.mrf.mxu0
      %v462 = vadd.f32 %v419, %v461
      %463 = vmatmul.bf16.gmra.mxu0 %v448
      %v464 = vpop.f32.mrf.mxu0
      %v465 = vadd.f32 %v419, %v464
      %v466 = vpop.f32.mrf.mxu0
      %v467 = vadd.f32 %v419, %v466
      %468 = vdwg.mxu0
      %v469 = vld [vmem:[%s397] sm:$0xf]
      %v470 = vld [vmem:[%s397 + $0x4] sm:$0xf]
      %v471 = vld [vmem:[%s397 + $0x8] sm:$0xf]
      %v472 = vld [vmem:[%s397 + $0xc] sm:$0xf]
      %v473 = vld [vmem:[%s3] sm:$0xf]
      %v474 = vld [vmem:[%s3 + $0x4] sm:$0xf]
      %v475 = vld [vmem:[%s3 + $0x8] sm:$0xf]
      %v476 = vld [vmem:[%s3 + $0xc] sm:$0xf]
      %v477 = vld [vmem:[%s5] sm:$0x1]
      %v479 = vperm.slane %v477, 0
      %v485 = vunpack.c.l.b16 %v469
      %v486 = vunpack.c.l.b16 %v470
      %v487 = vunpack.c.l.b16 %v471
      %v488 = vunpack.c.l.b16 %v472
      %v489 = vpack.c.b16 %v486, %v485
      %v490 = vpack.c.b16 %v488, %v487
      %v495 = vunpack.c.l.b16 %v473
      %v496 = vunpack.c.l.b16 %v474
      %v497 = vunpack.c.l.b16 %v475
      %v498 = vunpack.c.l.b16 %v476
      %v499 = vpack.c.b16 %v496, %v495
      %v500 = vpack.c.b16 %v498, %v497
      %v504 = vsel %vm443, %v489, 0
      %v507 = vsel %vm443, %v490, 0
      %509 = vmatpush.bf16.msra.mxu0 0
      %510 = vmatpush.bf16.msra.mxu0 0
      %511 = vmatpush.bf16.msra.mxu0 0
      %512 = vmatpush.bf16.msra.mxu0 0
      %513 = vmatpush.bf16.msra.mxu0 0
      %514 = vmatpush.bf16.msra.mxu0 0
      %515 = vmatpush.bf16.msra.mxu0 %v500
      %516 = vmatpush.bf16.msra.mxu0 %v499
      %517 = vmatmul.bf16.gmra.mxu0 %v504
      %v518 = vpop.f32.mrf.mxu0
      %v519 = vadd.f32 %v479, %v518
      %v520 = vpop.f32.mrf.mxu0
      %v521 = vadd.f32 %v479, %v520
      %522 = vmatmul.bf16.gmra.mxu0 %v507
      %v523 = vpop.f32.mrf.mxu0
      %v524 = vadd.f32 %v479, %v523
      %v525 = vpop.f32.mrf.mxu0
      %v526 = vadd.f32 %v479, %v525
      %527 = vdwg.mxu0
      %v528 = vld [vmem:[#allocation2] sm:$0xff]
      %v529 = vld [vmem:[#allocation3] sm:$0xff]
      %v530 = vld [vmem:[#allocation4] sm:$0xff]
      %v531 = vld [vmem:[#allocation5] sm:$0xff]
      %v532 = vpack.c.bf16 %v528, %v528
      %v533 = vld [vmem:[%s6] sm:$0xf]
      %v534 = vld [vmem:[%s6 + $0x4] sm:$0xf]
      %v535 = vld [vmem:[%s6 + $0x8] sm:$0xf]
      %v536 = vld [vmem:[%s6 + $0xc] sm:$0xf]
      %v541 = vunpack.c.l.b16 %v533
      %v542 = vunpack.c.l.b16 %v534
      %v543 = vunpack.c.l.b16 %v535
      %v544 = vunpack.c.l.b16 %v536
      %v545 = vpack.c.b16 %v542, %v541
      %v546 = vpack.c.b16 %v544, %v543
      %v550 = vsel %vm443, %v532, 0
      %552 = vmatpush.bf16.msra.mxu0 0
      %553 = vmatpush.bf16.msra.mxu0 0
      %554 = vmatpush.bf16.msra.mxu0 0
      %555 = vmatpush.bf16.msra.mxu0 0
      %556 = vmatpush.bf16.msra.mxu0 0
      %557 = vmatpush.bf16.msra.mxu0 0
      %558 = vmatpush.bf16.msra.mxu0 %v546
      %559 = vmatpush.bf16.msra.mxu0 %v545
      %560 = vmatmul.bf16.gmra.mxu0 %v550
      %v561 = vpop.f32.mrf.mxu0
      %v562 = vadd.f32 0.0, %v561
      %v563 = vpop.f32.mrf.mxu0
      %564 = vdwg.mxu0
      %v565 = vadd.f32 %v460, %v562
      %v566 = vxor.u32 %v565, 2147483648
      %v567 = vmul.f32 %v566, 1.442695
      %v568 = vpow.pop %v567
      %v569 = vadd.f32 %v568, 1.0
      %v570 = vrcp.pop %v569
      %v571 = vmul.f32 %v569, %v570
      %v572 = vsub.f32 1.0, %v571
      %v573 = vmul.f32 %v570, %v572
      %v574 = vadd.f32 %v570, %v573
      %vm575 = vweird.f32 %v569
      %vm576 = vweird.f32 %v570
      %vm577 = vmor %vm575, %vm576
      %v578 = vsel %vm577, %v570, %v574
      %v579 = vand.u32 2147483647, %v569
      %vm580 = vcmp.eq.f32.partialorder %v579, 8.507059e+37
      %v581 = vand.u32 %v569, 2147483648
      %v582 = vor.u32 1.1754944e-38, %v581
      %v583 = vsel %vm580, %v582, %v578
      %v584 = vmul.f32 1.0, %v583
      %v585 = vtanh.pop %v565
      %587 = vrot.lane.b32.xlu0 %v529, 32
      %v588 = vpop.permute.xlu0 %587
      %v590 = vmul.f32 %v584, %v588
      %592 = vrot.lane.b32.xlu0 %v585, 64
      %v593 = vpop.permute.xlu0 %592
      %v595 = vmul.f32 %v584, %v593
      %597 = vrot.lane.b32.xlu0 %v595, 32
      %v598 = vpop.permute.xlu0 %597
      %v600 = vadd.f32 %v590, %v598
      %v601 = vtanh.pop %v600
      %603 = vrot.lane.b32.xlu0 %v601, 64
      %v604 = vpop.permute.xlu0 %603
      %v606 = vmul.f32 %v584, %v604
      %v607 = vpack.c.bf16 %v530, %v530
      %v608 = vld [vmem:[%s7] sm:$0xf]
      %v609 = vld [vmem:[%s7 + $0x4] sm:$0xf]
      %v610 = vld [vmem:[%s7 + $0x8] sm:$0xf]
      %v611 = vld [vmem:[%s7 + $0xc] sm:$0xf]
      %v616 = vunpack.c.l.b16 %v608
      %v617 = vunpack.c.l.b16 %v609
      %v618 = vunpack.c.l.b16 %v610
      %v619 = vunpack.c.l.b16 %v611
      %v620 = vpack.c.b16 %v617, %v616
      %v621 = vpack.c.b16 %v619, %v618
      %v625 = vsel %vm443, %v607, 0
      %627 = vmatpush.bf16.msra.mxu0 0
      %628 = vmatpush.bf16.msra.mxu0 0
      %629 = vmatpush.bf16.msra.mxu0 0
      %630 = vmatpush.bf16.msra.mxu0 0
      %631 = vmatpush.bf16.msra.mxu0 0
      %632 = vmatpush.bf16.msra.mxu0 0
      %633 = vmatpush.bf16.msra.mxu0 %v621
      %634 = vmatpush.bf16.msra.mxu0 %v620
      %635 = vmatmul.bf16.gmra.mxu0 %v625
      %v636 = vpop.f32.mrf.mxu0
      %v637 = vadd.f32 0.0, %v636
      %v638 = vpop.f32.mrf.mxu0
      %639 = vdwg.mxu0
      %v640 = vadd.f32 %v526, %v637
      %v641 = vxor.u32 %v640, 2147483648
      %v642 = vmul.f32 %v641, 1.442695
      %v643 = vpow.pop %v642
      %v644 = vadd.f32 %v643, 1.0
      %v645 = vrcp.pop %v644
      %v646 = vmul.f32 %v644, %v645
      %v647 = vsub.f32 1.0, %v646
      %v648 = vmul.f32 %v645, %v647
      %v649 = vadd.f32 %v645, %v648
      %vm650 = vweird.f32 %v644
      %vm651 = vweird.f32 %v645
      %vm652 = vmor %vm650, %vm651
      %v653 = vsel %vm652, %v645, %v649
      %v654 = vand.u32 2147483647, %v644
      %vm655 = vcmp.eq.f32.partialorder %v654, 8.507059e+37
      %v656 = vand.u32 %v644, 2147483648
      %v657 = vor.u32 1.1754944e-38, %v656
      %v658 = vsel %vm655, %v657, %v653
      %v659 = vmul.f32 1.0, %v658
      %v660 = vtanh.pop %v640
      %662 = vrot.lane.b32.xlu0 %v531, 32
      %v663 = vpop.permute.xlu0 %662
      %v665 = vmul.f32 %v659, %v663
      %667 = vrot.lane.b32.xlu0 %v660, 64
      %v668 = vpop.permute.xlu0 %667
      %v670 = vmul.f32 %v659, %v668
      %672 = vrot.lane.b32.xlu0 %v670, 32
      %v673 = vpop.permute.xlu0 %672
      %v675 = vadd.f32 %v665, %v673
      %v676 = vtanh.pop %v675
      %678 = vrot.lane.b32.xlu0 %v676, 64
      %v679 = vpop.permute.xlu0 %678
      %v681 = vmul.f32 %v659, %v679
      %v682 = vpack.c.bf16 %v606, %v606
      %684 = vrot.lane.b32.xlu0 %v682, 32
      %v685 = vpop.permute.xlu0 %684
      %v687 = vsel %vm443, %v685, 0
      %689 = vmatpush.bf16.msra.mxu0 0
      %690 = vmatpush.bf16.msra.mxu0 0
      %691 = vmatpush.bf16.msra.mxu0 0
      %692 = vmatpush.bf16.msra.mxu0 0
      %693 = vmatpush.bf16.msra.mxu0 0
      %694 = vmatpush.bf16.msra.mxu0 0
      %695 = vmatpush.bf16.msra.mxu0 %v546
      %696 = vmatpush.bf16.msra.mxu0 %v545
      %697 = vmatmul.bf16.gmra.mxu0 %v687
      %v698 = vpop.f32.mrf.mxu0
      %v699 = vadd.f32 0.0, %v698
      %v700 = vpop.f32.mrf.mxu0
      %701 = vdwg.mxu0
      %v702 = vadd.f32 %v462, %v699
      %v703 = vxor.u32 %v702, 2147483648
      %v704 = vmul.f32 %v703, 1.442695
      %v705 = vpow.pop %v704
      %v706 = vadd.f32 %v705, 1.0
      %v707 = vrcp.pop %v706
      %v708 = vmul.f32 %v706, %v707
      %v709 = vsub.f32 1.0, %v708
      %v710 = vmul.f32 %v707, %v709
      %v711 = vadd.f32 %v707, %v710
      %vm712 = vweird.f32 %v706
      %vm713 = vweird.f32 %v707
      %vm714 = vmor %vm712, %vm713
      %v715 = vsel %vm714, %v707, %v711
      %v716 = vand.u32 2147483647, %v706
      %vm717 = vcmp.eq.f32.partialorder %v716, 8.507059e+37
      %v718 = vand.u32 %v706, 2147483648
      %v719 = vor.u32 1.1754944e-38, %v718
      %v720 = vsel %vm717, %v719, %v715
      %v721 = vmul.f32 1.0, %v720
      %v722 = vtanh.pop %v702
      %v723 = vmul.f32 %v721, %v600
      %725 = vrot.lane.b32.xlu0 %v722, 64
      %v726 = vpop.permute.xlu0 %725
      %v728 = vmul.f32 %v721, %v726
      %730 = vrot.lane.b32.xlu0 %v728, 32
      %v731 = vpop.permute.xlu0 %730
      %v733 = vadd.f32 %v723, %v731
      %v734 = vtanh.pop %v733
      %736 = vrot.lane.b32.xlu0 %v734, 64
      %v737 = vpop.permute.xlu0 %736
      %v739 = vmul.f32 %v721, %v737
      %v740 = vpack.c.bf16 %v681, %v681
      %742 = vrot.lane.b32.xlu0 %v740, 32
      %v743 = vpop.permute.xlu0 %742
      %v745 = vsel %vm443, %v743, 0
      %747 = vmatpush.bf16.msra.mxu0 0
      %748 = vmatpush.bf16.msra.mxu0 0
      %749 = vmatpush.bf16.msra.mxu0 0
      %750 = vmatpush.bf16.msra.mxu0 0
      %751 = vmatpush.bf16.msra.mxu0 0
      %752 = vmatpush.bf16.msra.mxu0 0
      %753 = vmatpush.bf16.msra.mxu0 %v621
      %754 = vmatpush.bf16.msra.mxu0 %v620
      %755 = vmatmul.bf16.gmra.mxu0 %v745
      %v756 = vpop.f32.mrf.mxu0
      %v757 = vadd.f32 0.0, %v756
      %v758 = vpop.f32.mrf.mxu0
      %759 = vdwg.mxu0
      %v760 = vadd.f32 %v524, %v757
      %v761 = vxor.u32 %v760, 2147483648
      %v762 = vmul.f32 %v761, 1.442695
      %v763 = vpow.pop %v762
      %v764 = vadd.f32 %v763, 1.0
      %v765 = vrcp.pop %v764
      %v766 = vmul.f32 %v764, %v765
      %v767 = vsub.f32 1.0, %v766
      %v768 = vmul.f32 %v765, %v767
      %v769 = vadd.f32 %v765, %v768
      %vm770 = vweird.f32 %v764
      %vm771 = vweird.f32 %v765
      %vm772 = vmor %vm770, %vm771
      %v773 = vsel %vm772, %v765, %v769
      %v774 = vand.u32 2147483647, %v764
      %vm775 = vcmp.eq.f32.partialorder %v774, 8.507059e+37
      %v776 = vand.u32 %v764, 2147483648
      %v777 = vor.u32 1.1754944e-38, %v776
      %v778 = vsel %vm775, %v777, %v773
      %v779 = vmul.f32 1.0, %v778
      %v780 = vtanh.pop %v760
      %v781 = vmul.f32 %v779, %v675
      %783 = vrot.lane.b32.xlu0 %v780, 64
      %v784 = vpop.permute.xlu0 %783
      %v786 = vmul.f32 %v779, %v784
      %788 = vrot.lane.b32.xlu0 %v786, 32
      %v789 = vpop.permute.xlu0 %788
      %v791 = vadd.f32 %v781, %v789
      %v792 = vtanh.pop %v791
      %794 = vrot.lane.b32.xlu0 %v792, 64
      %v795 = vpop.permute.xlu0 %794
      %v797 = vmul.f32 %v779, %v795
      %v798 = vpack.c.bf16 %v739, %v739
      %800 = vrot.lane.b32.xlu0 %v798, 32
      %v801 = vpop.permute.xlu0 %800
      %v803 = vsel %vm443, %v801, 0
      %805 = vmatpush.bf16.msra.mxu0 0
      %806 = vmatpush.bf16.msra.mxu0 0
      %807 = vmatpush.bf16.msra.mxu0 0
      %808 = vmatpush.bf16.msra.mxu0 0
      %809 = vmatpush.bf16.msra.mxu0 0
      %810 = vmatpush.bf16.msra.mxu0 0
      %811 = vmatpush.bf16.msra.mxu0 %v546
      %812 = vmatpush.bf16.msra.mxu0 %v545
      %813 = vmatmul.bf16.gmra.mxu0 %v803
      %v814 = vpop.f32.mrf.mxu0
      %v815 = vadd.f32 0.0, %v814
      %v816 = vpop.f32.mrf.mxu0
      %817 = vdwg.mxu0
      %v818 = vadd.f32 %v465, %v815
      %v819 = vxor.u32 %v818, 2147483648
      %v820 = vmul.f32 %v819, 1.442695
      %v821 = vpow.pop %v820
      %v822 = vadd.f32 %v821, 1.0
      %v823 = vrcp.pop %v822
      %v824 = vmul.f32 %v822, %v823
      %v825 = vsub.f32 1.0, %v824
      %v826 = vmul.f32 %v823, %v825
      %v827 = vadd.f32 %v823, %v826
      %vm828 = vweird.f32 %v822
      %vm829 = vweird.f32 %v823
      %vm830 = vmor %vm828, %vm829
      %v831 = vsel %vm830, %v823, %v827
      %v832 = vand.u32 2147483647, %v822
      %vm833 = vcmp.eq.f32.partialorder %v832, 8.507059e+37
      %v834 = vand.u32 %v822, 2147483648
      %v835 = vor.u32 1.1754944e-38, %v834
      %v836 = vsel %vm833, %v835, %v831
      %v837 = vmul.f32 1.0, %v836
      %v838 = vtanh.pop %v818
      %v839 = vmul.f32 %v837, %v733
      %841 = vrot.lane.b32.xlu0 %v838, 64
      %v842 = vpop.permute.xlu0 %841
      %v844 = vmul.f32 %v837, %v842
      %846 = vrot.lane.b32.xlu0 %v844, 32
      %v847 = vpop.permute.xlu0 %846
      %v849 = vadd.f32 %v839, %v847
      %v850 = vtanh.pop %v849
      %852 = vrot.lane.b32.xlu0 %v850, 64
      %v853 = vpop.permute.xlu0 %852
      %v855 = vmul.f32 %v837, %v853
      %v856 = vpack.c.bf16 %v797, %v797
      %858 = vrot.lane.b32.xlu0 %v856, 32
      %v859 = vpop.permute.xlu0 %858
      %v861 = vsel %vm443, %v859, 0
      %863 = vmatpush.bf16.msra.mxu0 0
      %864 = vmatpush.bf16.msra.mxu0 0
      %865 = vmatpush.bf16.msra.mxu0 0
      %866 = vmatpush.bf16.msra.mxu0 0
      %867 = vmatpush.bf16.msra.mxu0 0
      %868 = vmatpush.bf16.msra.mxu0 0
      %869 = vmatpush.bf16.msra.mxu0 %v621
      %870 = vmatpush.bf16.msra.mxu0 %v620
      %871 = vmatmul.bf16.gmra.mxu0 %v861
      %v872 = vpop.f32.mrf.mxu0
      %v873 = vadd.f32 0.0, %v872
      %v874 = vpop.f32.mrf.mxu0
      %875 = vdwg.mxu0
      %v876 = vadd.f32 %v521, %v873
      %v877 = vxor.u32 %v876, 2147483648
      %v878 = vmul.f32 %v877, 1.442695
      %v879 = vpow.pop %v878
      %v880 = vadd.f32 %v879, 1.0
      %v881 = vrcp.pop %v880
      %v882 = vmul.f32 %v880, %v881
      %v883 = vsub.f32 1.0, %v882
      %v884 = vmul.f32 %v881, %v883
      %v885 = vadd.f32 %v881, %v884
      %vm886 = vweird.f32 %v880
      %vm887 = vweird.f32 %v881
      %vm888 = vmor %vm886, %vm887
      %v889 = vsel %vm888, %v881, %v885
      %v890 = vand.u32 2147483647, %v880
      %vm891 = vcmp.eq.f32.partialorder %v890, 8.507059e+37
      %v892 = vand.u32 %v880, 2147483648
      %v893 = vor.u32 1.1754944e-38, %v892
      %v894 = vsel %vm891, %v893, %v889
      %v895 = vmul.f32 1.0, %v894
      %v896 = vtanh.pop %v876
      %v897 = vmul.f32 %v895, %v791
      %899 = vrot.lane.b32.xlu0 %v896, 64
      %v900 = vpop.permute.xlu0 %899
      %v902 = vmul.f32 %v895, %v900
      %904 = vrot.lane.b32.xlu0 %v902, 32
      %v905 = vpop.permute.xlu0 %904
      %v907 = vadd.f32 %v897, %v905
      %v908 = vtanh.pop %v907
      %910 = vrot.lane.b32.xlu0 %v908, 64
      %v911 = vpop.permute.xlu0 %910
      %v913 = vmul.f32 %v895, %v911
      %v914 = vpack.c.bf16 %v855, %v855
      %916 = vrot.lane.b32.xlu0 %v914, 32
      %v917 = vpop.permute.xlu0 %916
      %v919 = vsel %vm443, %v917, 0
      %921 = vmatpush.bf16.msra.mxu0 0
      %922 = vmatpush.bf16.msra.mxu0 0
      %923 = vmatpush.bf16.msra.mxu0 0
      %924 = vmatpush.bf16.msra.mxu0 0
      %925 = vmatpush.bf16.msra.mxu0 0
      %926 = vmatpush.bf16.msra.mxu0 0
      %927 = vmatpush.bf16.msra.mxu0 %v546
      %928 = vmatpush.bf16.msra.mxu0 %v545
      %929 = vmatmul.bf16.gmra.mxu0 %v919
      %v930 = vpop.f32.mrf.mxu0
      %v931 = vadd.f32 0.0, %v930
      %v932 = vpop.f32.mrf.mxu0
      %933 = vdwg.mxu0
      %v934 = vadd.f32 %v467, %v931
      %v935 = vxor.u32 %v934, 2147483648
      %v936 = vmul.f32 %v935, 1.442695
      %v937 = vpow.pop %v936
      %v938 = vadd.f32 %v937, 1.0
      %v939 = vrcp.pop %v938
      %v940 = vmul.f32 %v938, %v939
      %v941 = vsub.f32 1.0, %v940
      %v942 = vmul.f32 %v939, %v941
      %v943 = vadd.f32 %v939, %v942
      %vm944 = vweird.f32 %v938
      %vm945 = vweird.f32 %v939
      %vm946 = vmor %vm944, %vm945
      %v947 = vsel %vm946, %v939, %v943
      %v948 = vand.u32 2147483647, %v938
      %vm949 = vcmp.eq.f32.partialorder %v948, 8.507059e+37
      %v950 = vand.u32 %v938, 2147483648
      %v951 = vor.u32 1.1754944e-38, %v950
      %v952 = vsel %vm949, %v951, %v947
      %v953 = vmul.f32 1.0, %v952
      %v954 = vtanh.pop %v934
      %v955 = vmul.f32 %v953, %v849
      %957 = vrot.lane.b32.xlu0 %v954, 64
      %v958 = vpop.permute.xlu0 %957
      %v960 = vmul.f32 %v953, %v958
      %962 = vrot.lane.b32.xlu0 %v960, 32
      %v963 = vpop.permute.xlu0 %962
      %v965 = vadd.f32 %v955, %v963
      %v966 = vtanh.pop %v965
      %968 = vrot.lane.b32.xlu0 %v966, 64
      %v969 = vpop.permute.xlu0 %968
      %v971 = vmul.f32 %v953, %v969
      %v972 = vpack.c.bf16 %v913, %v913
      %974 = vrot.lane.b32.xlu0 %v972, 32
      %v975 = vpop.permute.xlu0 %974
      %v977 = vsel %vm443, %v975, 0
      %979 = vmatpush.bf16.msra.mxu0 0
      %980 = vmatpush.bf16.msra.mxu0 0
      %981 = vmatpush.bf16.msra.mxu0 0
      %982 = vmatpush.bf16.msra.mxu0 0
      %983 = vmatpush.bf16.msra.mxu0 0
      %984 = vmatpush.bf16.msra.mxu0 0
      %985 = vmatpush.bf16.msra.mxu0 %v621
      %986 = vmatpush.bf16.msra.mxu0 %v620
      %987 = vmatmul.bf16.gmra.mxu0 %v977
      %v988 = vpop.f32.mrf.mxu0
      %v989 = vadd.f32 0.0, %v988
      %v990 = vpop.f32.mrf.mxu0
      %991 = vdwg.mxu0
      %v992 = vadd.f32 %v519, %v989
      %v993 = vxor.u32 %v992, 2147483648
      %v994 = vmul.f32 %v993, 1.442695
      %v995 = vpow.pop %v994
      %v996 = vadd.f32 %v995, 1.0
      %v997 = vrcp.pop %v996
      %v998 = vmul.f32 %v996, %v997
      %v999 = vsub.f32 1.0, %v998
      %v1000 = vmul.f32 %v997, %v999
      %v1001 = vadd.f32 %v997, %v1000
      %vm1002 = vweird.f32 %v996
      %vm1003 = vweird.f32 %v997
      %vm1004 = vmor %vm1002, %vm1003
      %v1005 = vsel %vm1004, %v997, %v1001
      %v1006 = vand.u32 2147483647, %v996
      %vm1007 = vcmp.eq.f32.partialorder %v1006, 8.507059e+37
      %v1008 = vand.u32 %v996, 2147483648
      %v1009 = vor.u32 1.1754944e-38, %v1008
      %v1010 = vsel %vm1007, %v1009, %v1005
      %v1011 = vmul.f32 1.0, %v1010
      %v1012 = vtanh.pop %v992
      %v1013 = vmul.f32 %v1011, %v907
      %1015 = vrot.lane.b32.xlu0 %v1012, 64
      %v1016 = vpop.permute.xlu0 %1015
      %v1018 = vmul.f32 %v1011, %v1016
      %1020 = vrot.lane.b32.xlu0 %v1018, 32
      %v1021 = vpop.permute.xlu0 %1020
      %v1023 = vadd.f32 %v1013, %v1021
      %v1024 = vtanh.pop %v1023
      %1026 = vrot.lane.b32.xlu0 %v1024, 64
      %v1027 = vpop.permute.xlu0 %1026
      %v1029 = vmul.f32 %v1011, %v1027
      %1031 = vrot.lane.b32.xlu0 %v971, 32
      %v1032 = vpop.permute.xlu0 %1031
      %1034 = vst.msk [vmem:[#allocation2] sm:$0xff] %vm443, %v1032
      %1036 = vrot.lane.b32.xlu0 %v965, 96
      %v1037 = vpop.permute.xlu0 %1036
      %1039 = vst.msk [vmem:[#allocation3] sm:$0xff] %vm443, %v1037
      %1041 = vrot.lane.b32.xlu0 %v1029, 32
      %v1042 = vpop.permute.xlu0 %1041
      %1044 = vst.msk [vmem:[#allocation4] sm:$0xff] %vm443, %v1042
      %1046 = vrot.lane.b32.xlu0 %v1023, 96
      %v1047 = vpop.permute.xlu0 %1046
      %1049 = vst.msk [vmem:[#allocation5] sm:$0xff] %vm443, %v1047
      %p1050 = scmp.eq.s32.totalorder %s22, 1
      // Predicated region
      $region69: #{classifier_forward.1} parent=63 // pred_check
        %p1051 = pneg %p1050
      $region70: #{classifier_forward.1} parent=63 // pred_check_branch
        %1053 = sbr.rel (%p1051) target = $region72
      $region71: #{classifier_forward.1} parent=63 // pred_region
        %v1054 = vpack.c.bf16 %v971, %v971
        %v1055 = vld [vmem:[%s8] sm:$0xf]
        %v1056 = vld [vmem:[%s8 + $0x4] sm:$0xf]
        %v1057 = vld [vmem:[%s8 + $0x8] sm:$0xf]
        %v1058 = vld [vmem:[%s8 + $0xc] sm:$0xf]
        %v1059 = vpack.c.bf16 %v1029, %v1029
        %v1060 = vld [vmem:[%s9] sm:$0xf]
        %v1061 = vld [vmem:[%s9 + $0x4] sm:$0xf]
        %v1062 = vld [vmem:[%s9 + $0x8] sm:$0xf]
        %v1063 = vld [vmem:[%s9 + $0xc] sm:$0xf]
        %1065 = vrot.lane.b32.xlu0 %v1059, 32
        %v1066 = vpop.permute.xlu0 %1065
        %v1071 = vunpack.c.l.b16 %v1060
        %v1072 = vunpack.c.l.b16 %v1061
        %v1073 = vunpack.c.l.b16 %v1062
        %v1074 = vunpack.c.l.b16 %v1063
        %v1075 = vpack.c.b16 %v1072, %v1071
        %v1076 = vpack.c.b16 %v1074, %v1073
        %v1080 = vsel %vm443, %v1066, 0
        %1082 = vmatpush.bf16.msra.mxu0 0
        %1083 = vmatpush.bf16.msra.mxu0 0
        %1084 = vmatpush.bf16.msra.mxu0 0
        %1085 = vmatpush.bf16.msra.mxu0 0
        %1086 = vmatpush.bf16.msra.mxu0 0
        %1087 = vmatpush.bf16.msra.mxu0 0
        %1088 = vmatpush.bf16.msra.mxu0 %v1076
        %1089 = vmatpush.bf16.msra.mxu0 %v1075
        %1090 = vmatmul.bf16.gmra.mxu0 %v1080
        %v1091 = vpop.f32.mrf.mxu0
        %v1092 = vadd.f32 0.0, %v1091
        %v1093 = vpop.f32.mrf.mxu0
        %1094 = vdwg.mxu0
        %1096 = vrot.lane.b32.xlu0 %v1054, 32
        %v1097 = vpop.permute.xlu0 %1096
        %v1102 = vunpack.c.l.b16 %v1055
        %v1103 = vunpack.c.l.b16 %v1056
        %v1104 = vunpack.c.l.b16 %v1057
        %v1105 = vunpack.c.l.b16 %v1058
        %v1106 = vpack.c.b16 %v1103, %v1102
        %v1107 = vpack.c.b16 %v1105, %v1104
        %v1111 = vsel %vm443, %v1097, 0
        %1113 = vmatpush.bf16.msra.mxu0 0
        %1114 = vmatpush.bf16.msra.mxu0 0
        %1115 = vmatpush.bf16.msra.mxu0 0
        %1116 = vmatpush.bf16.msra.mxu0 0
        %1117 = vmatpush.bf16.msra.mxu0 0
        %1118 = vmatpush.bf16.msra.mxu0 0
        %1119 = vmatpush.bf16.msra.mxu0 %v1107
        %1120 = vmatpush.bf16.msra.mxu0 %v1106
        %1121 = vmatmul.bf16.gmra.mxu0 %v1111
        %v1122 = vpop.f32.mrf.mxu0
        %v1123 = vadd.f32 %v1092, %v1122
        %v1124 = vpop.f32.mrf.mxu0
        %1125 = vdwg.mxu0
        %v1126 = vld [vmem:[%s10] sm:$0x1]
        %v1128 = vperm.slane %v1126, 0
        %v1130 = vadd.f32 %v1123, %v1128
        %vm1131 = vcmask 31744
        %1132 = vst.msk [vmem:[%s11] sm:$0xff] %vm1131, %v1130
      $region72: #{classifier_forward.1} parent=63 // pred_fallthru
        _
      // Predicated region
      $region73: #{classifier_forward.1} parent=63 // pred_check
        %p1133 = pneg %p278
      $region74: #{classifier_forward.1} parent=63 // pred_check_branch
        %1135 = sbr.rel (%p1133) target = $region76
      $region75: #{classifier_forward.1} parent=63 // pred_region
        _
      $region76: #{classifier_forward.1} parent=63 // pred_fallthru
        _
      // Predicated region
      $region77: #{classifier_forward.1} parent=63 // pred_check
        %p1136 = pneg %p278
      $region78: #{classifier_forward.1} parent=63 // pred_check_branch
        %1138 = sbr.rel (%p1136) target = $region80
      $region79: #{classifier_forward.1} parent=63 // pred_region
        _
      $region80: #{classifier_forward.1} parent=63 // pred_fallthru
        _
    $region64: #{classifier_forward.1} parent=5 // pred_fallthru
      _
    %p1139 = scmp.le.s32.totalorder 2, %s17
    // Predicated region
    $region81: #{classifier_forward.1} parent=5 // pred_check
      %p1140 = pneg %p1139
    $region82: #{classifier_forward.1} parent=5 // pred_check_branch
      %1142 = sbr.rel (%p1140) target = $region84
    $region83: #{classifier_forward.1} parent=5 // pred_region
      %s1143 = ssub.s32 %s17, 2
    $region84: #{classifier_forward.1} parent=5 // pred_fallthru
      _
  $region6: #{classifier_forward.1} parent=0 // loop_footer
    %s21 = sadd.s32 1, %s17
  $region7: #{classifier_forward.1} parent=0 // loop_footer_branch
    %16 = sbr.rel target = $region3
  $region8: #{classifier_forward.1} parent=0 // loop_exit
    _

</llo_original>
